<compile_context>
chip_gen: v5e
topology: v5e:2x2
jax: 0.10.0
libtpu: 0.0.40
codegen_flags: <defaults>
</compile_context>

<pallas_src>
import jax
import jax.numpy as jnp
import numpy as np
from jax.experimental import pallas as pl
from jax.experimental.pallas import tpu as pltpu

LANES = 128  # every in-kernel activation is padded to this channel width


# ----------------------------- kernel helpers (traced inside the kernel) ----

def _shift_rows(xf, delta, seg):
    """result[r] = xf[r + delta] within each length-`seg` row segment,
    zero at the segment edges (== conv zero padding).  delta in {-1, +1}."""
    R, C = xf.shape
    zrow = jnp.zeros((1, C), jnp.float32)
    if delta == -1:                       # x[t-1]
        shifted = jnp.concatenate([zrow, xf[:R - 1, :]], axis=0)
        edge = 0
    else:                                 # x[t+1]
        shifted = jnp.concatenate([xf[1:, :], zrow], axis=0)
        edge = seg - 1
    row = jax.lax.broadcasted_iota(jnp.int32, (R, 1), 0)
    # zero the rows that crossed a (batch) segment boundary
    return jnp.where((row % seg) == edge, 0.0, shifted)


def _window3(xf, seg):
    """[x[t-1] | x[t] | x[t+1]] on the lane axis: (R, 128) -> (R, 384).
    Lane-aligned concat (each piece is 128 lanes wide)."""
    prev = _shift_rows(xf, -1, seg)
    nxt = _shift_rows(xf, +1, seg)
    return jnp.concatenate([prev, xf, nxt], axis=-1)


def _bn_relu(xf, eps=1e-5):
    """BatchNorm1d (train mode, gamma=1, beta=0) + ReLU with one-pass stats.
    Zero-padded lanes stay exactly zero."""
    inv_n = 1.0 / xf.shape[0]
    s1 = jnp.sum(xf, axis=0, keepdims=True)            # (1, C)
    s2 = jnp.sum(xf * xf, axis=0, keepdims=True)       # (1, C)
    mean = s1 * inv_n
    var = s2 * inv_n - mean * mean                     # biased, BN train mode
    scale = jax.lax.rsqrt(var + eps)
    return jnp.maximum(xf * scale - mean * scale, 0.0)


def _up_conv(xf, w, b, seg):
    """Fused nearest-x2 upsample + Conv1d(k=3, pad=1), channels-last.

    xf : (R, 128) un-upsampled rows;   w : (384, 256) packed weights whose
    columns are [even-phase outputs (128) | odd-phase outputs (128)];
    b : (1, 256).  Returns the time-interleaved output (2R, 128)."""
    win = _window3(xf, seg)                                         # (R, 384)
    y = jnp.dot(win, w, preferred_element_type=jnp.float32) + b     # (R, 256)
    # interleave even/odd phases along time: rows are (batch, time), so the
    # row-major reshape is exactly the x2-upsampled output ordering.
    R = xf.shape[0]
    return y.reshape(R, 2, LANES).reshape(2 * R, LANES)


# ----------------------------------- kernel ---------------------------------

def decoder_kernel(z_ref, wfc_ref, bfc_ref,
                   w1_ref, b1_ref, w2_ref, b2_ref, w3_ref, b3_ref,
                   o_ref):
    B = z_ref.shape[0]
    T0 = wfc_ref.shape[1] // LANES

    # fc: (B, D) @ (D, T0*128); columns pre-permuted to (t, c) order
    x = jnp.dot(z_ref[...], wfc_ref[...],
                preferred_element_type=jnp.float32) + bfc_ref[...]
    x = x.reshape(B, T0, LANES).reshape(B * T0, LANES)       # rows = (b, t)

    # up1 -> conv1 -> bn1 -> relu      (B*T0, 128) -> (B*2T0, 128)
    h = _bn_relu(_up_conv(x, w1_ref[...], b1_ref[...], seg=T0))

    # up2 -> conv2 -> bn2 -> relu      (B*2T0, 128) -> (B*4T0, 128)
    g = _bn_relu(_up_conv(h, w2_ref[...], b2_ref[...], seg=2 * T0))

    # conv_6_bands (no upsample); output channels padded to 128 lanes
    win = _window3(g, seg=4 * T0)                            # (B*4T0, 384)
    out = jnp.dot(win, w3_ref[...],
                  preferred_element_type=jnp.float32) + b3_ref[...]
    o_ref[...] = out.reshape(B, 4 * T0, LANES)               # lane-dense store


# ----------------------------------- wrapper --------------------------------

def decoder_forward(z, kparams):
    wfc_k, bfc_k, w1, b1, w2, b2, w3, b3 = kparams
    B = z.shape[0]
    T0 = wfc_k.shape[1] // LANES
    T = 4 * T0

    args = (z, wfc_k, bfc_k, w1, b1, w2, b2, w3, b3)
    in_specs = [pl.BlockSpec(a.shape, lambda i, nd=a.ndim: (0,) * nd)
                for a in args]
    out_spec = pl.BlockSpec((B, T, LANES), lambda i: (0, 0, 0))

    out = pl.pallas_call(
        decoder_kernel,
        out_shape=jax.ShapeDtypeStruct((B, T, LANES), jnp.float32),
        grid=(1,),   # BatchNorm needs whole-batch stats -> single grid step
        in_specs=in_specs,
        out_specs=out_spec,
        compiler_params=pltpu.CompilerParams(
            dimension_semantics=("arbitrary",)),
    )(*args)
    return out[..., :6]          # strip channel padding outside the kernel


# ------------------------------- parameters ---------------------------------

def init_params(key, D, T0):
    k1, k2, k3, k4 = jax.random.split(key, 4)
    # fc: xavier_uniform, torch weight shape (out, in) = (T0*128, D)
    a = np.sqrt(6.0 / (D + T0 * 128))
    wfc = jax.random.uniform(k1, (T0 * 128, D), jnp.float32, -a, a)
    bfc = jnp.zeros((T0 * 128,), jnp.float32)

    def kaiming_out(k, shape):  # torch Conv1d weight (Cout, Cin, K), fan_out=Cout*K
        std = np.sqrt(2.0 / (shape[0] * shape[2]))
        return std * jax.random.normal(k, shape, jnp.float32)

    w1 = kaiming_out(k2, (64, 128, 3)); b1 = jnp.zeros((64,), jnp.float32)
    w2 = kaiming_out(k3, (32, 64, 3));  b2 = jnp.zeros((32,), jnp.float32)
    w3 = kaiming_out(k4, (6, 32, 3));   b3 = jnp.zeros((6,), jnp.float32)
    return dict(wfc=wfc, bfc=bfc, w1=w1, b1=b1, w2=w2, b2=b2, w3=w3, b3=b3)


def make_kernel_params(p, T0, D):
    # fc: permute columns so the kernel's fc output column index is t*128 + c
    # (PyTorch: index c*T0 + t, then view(B, 128, T0)).
    wfc_k = (p['wfc'].reshape(128, T0, D).transpose(1, 0, 2)
             .reshape(T0 * 128, D).T)                        # (D, T0*128)
    bfc_k = p['bfc'].reshape(128, T0).T.reshape(1, T0 * 128)

    def taps(w):                     # torch (Cout, Cin, 3) -> 3 x (Cin, Cout)
        wk = jnp.transpose(w, (2, 1, 0))
        return wk[0], wk[1], wk[2]

    def pack_up_conv(w, b):
        # Fused nearest-x2 upsample + k=3 conv, padded to 128 lanes per phase.
        # Window row blocks: [x[t-1] ; x[t] ; x[t+1]]; columns: [even | odd]
        #   even: out[2t]   = x[t-1] @ W0      + x[t]   @ (W1+W2)
        #   odd : out[2t+1] = x[t]   @ (W0+W1) + x[t+1] @ W2
        w0, w1, w2 = taps(w)
        cin, cout = w0.shape
        even = (w0, w1 + w2, jnp.zeros_like(w0))
        odd = (jnp.zeros_like(w0), w0 + w1, w2)
        blocks = []
        for e, o in zip(even, odd):
            blk = jnp.zeros((LANES, 2 * LANES), jnp.float32)
            blk = blk.at[:cin, :cout].set(e)
            blk = blk.at[:cin, LANES:LANES + cout].set(o)
            blocks.append(blk)
        wf = jnp.concatenate(blocks, axis=0)                 # (384, 256)
        bf = jnp.zeros((1, 2 * LANES), jnp.float32)
        bf = bf.at[0, :cout].set(b).at[0, LANES:LANES + cout].set(b)
        return wf, bf

    def pack_conv(w, b):
        # Plain k=3 conv: taps stacked on the contraction axis, Cout padded
        # to 128 so the final store is lane-dense.
        w0, w1, w2 = taps(w)
        cin, cout = w0.shape
        blocks = []
        for t in (w0, w1, w2):
            blk = jnp.zeros((LANES, LANES), jnp.float32)
            blk = blk.at[:cin, :cout].set(t)
            blocks.append(blk)
        wf = jnp.concatenate(blocks, axis=0)                 # (384, 128)
        bf = jnp.zeros((1, LANES), jnp.float32).at[0, :cout].set(b)
        return wf, bf

    w1f, b1f = pack_up_conv(p['w1'], p['b1'])
    w2f, b2f = pack_up_conv(p['w2'], p['b2'])
    w3f, b3f = pack_conv(p['w3'], p['b3'])
    return (wfc_k, bfc_k, w1f, b1f, w2f, b2f, w3f, b3f)


# ------------------------- pure-JAX reference (NCL, like PyTorch) ------------

def reference_forward(z, p, T0):
    B = z.shape[0]
    x = (z @ p['wfc'].T + p['bfc']).reshape(B, 128, T0)      # (B, 128, T0)

    def conv(x, w, b):
        y = jax.lax.conv_general_dilated(
            x, w, window_strides=(1,), padding=[(1, 1)],
            dimension_numbers=('NCH', 'OIH', 'NCH'))
        return y + b[None, :, None]

    def bn(x, eps=1e-5):
        mean = jnp.mean(x, axis=(0, 2), keepdims=True)
        var = jnp.mean((x - mean) ** 2, axis=(0, 2), keepdims=True)
        return (x - mean) / jnp.sqrt(var + eps)

    x = jnp.repeat(x, 2, axis=2)
    x = jax.nn.relu(bn(conv(x, p['w1'], p['b1'])))
    x = jnp.repeat(x, 2, axis=2)
    x = jax.nn.relu(bn(conv(x, p['w2'], p['b2'])))
    x = conv(x, p['w3'], p['b3'])
    return jnp.transpose(x, (0, 2, 1))                       # (B, T, 6)


# ----------------------------------- main ------------------------------------

if __name__ == "__main__":
    B, D, T0 = 2, 32, 8          # latent_and_meta = 32, T0 = 8 -> T = 32
    key = jax.random.PRNGKey(0)
    kz, kp = jax.random.split(key)
    z = jax.random.normal(kz, (B, D), jnp.float32)

    params = init_params(kp, D, T0)
    kparams = make_kernel_params(params, T0, D)

    out = decoder_forward(z, kparams)
    out = jax.block_until_ready(out)

    assert out.shape == (B, 4 * T0, 6), out.shape
    ref = reference_forward(z, params, T0)
    # single-pass (default precision) MXU matmuls vs XLA reference: allow a
    # bf16-pass-level tolerance; semantic errors would be orders larger.
    np.testing.assert_allclose(np.asarray(out), np.asarray(ref),
                               rtol=2e-2, atol=2e-2)
    print("KERNEL_OK")
</pallas_src>

<mosaic_0001>
module attributes {stable_mosaic.version = 11 : i64} {
  func.func @decoder_kernel(%arg0: i32, %arg1: memref<2x32xf32, #tpu.memory_space<vmem>>, %arg2: memref<32x1024xf32, #tpu.memory_space<vmem>>, %arg3: memref<1x1024xf32, #tpu.memory_space<vmem>>, %arg4: memref<384x256xf32, #tpu.memory_space<vmem>>, %arg5: memref<1x256xf32, #tpu.memory_space<vmem>>, %arg6: memref<384x256xf32, #tpu.memory_space<vmem>>, %arg7: memref<1x256xf32, #tpu.memory_space<vmem>>, %arg8: memref<384x128xf32, #tpu.memory_space<vmem>>, %arg9: memref<1x128xf32, #tpu.memory_space<vmem>>, %arg10: memref<2x32x128xf32, #tpu.memory_space<vmem>>) attributes {dimension_semantics = [#tpu.dimension_semantics<arbitrary>], iteration_bounds = array<i64: 1>, scalar_prefetch = 0 : i64, scratch_operands = 0 : i64, tpu.core_type = #tpu.core_type<tc>, window_params = [{pipeline_mode = #tpu.pipeline_mode<synchronous>, transform_indices = @transform_0, window_bounds = array<i64: 2, 32>}, {pipeline_mode = #tpu.pipeline_mode<synchronous>, transform_indices = @transform_1, window_bounds = array<i64: 32, 1024>}, {pipeline_mode = #tpu.pipeline_mode<synchronous>, transform_indices = @transform_2, window_bounds = array<i64: 1, 1024>}, {pipeline_mode = #tpu.pipeline_mode<synchronous>, transform_indices = @transform_3, window_bounds = array<i64: 384, 256>}, {pipeline_mode = #tpu.pipeline_mode<synchronous>, transform_indices = @transform_4, window_bounds = array<i64: 1, 256>}, {pipeline_mode = #tpu.pipeline_mode<synchronous>, transform_indices = @transform_5, window_bounds = array<i64: 384, 256>}, {pipeline_mode = #tpu.pipeline_mode<synchronous>, transform_indices = @transform_6, window_bounds = array<i64: 1, 256>}, {pipeline_mode = #tpu.pipeline_mode<synchronous>, transform_indices = @transform_7, window_bounds = array<i64: 384, 128>}, {pipeline_mode = #tpu.pipeline_mode<synchronous>, transform_indices = @transform_8, window_bounds = array<i64: 1, 128>}, {pipeline_mode = #tpu.pipeline_mode<synchronous>, transform_indices = @transform_9, window_bounds = array<i64: 2, 32, 128>}]} {
    %c0 = arith.constant 0 : index
    %c0_0 = arith.constant 0 : index
    %0 = vector.load %arg1[%c0, %c0_0] : memref<2x32xf32, #tpu.memory_space<vmem>>, vector<2x32xf32>
    %c0_1 = arith.constant 0 : index
    %c0_2 = arith.constant 0 : index
    %1 = vector.load %arg2[%c0_1, %c0_2] : memref<32x1024xf32, #tpu.memory_space<vmem>>, vector<32x1024xf32>
    %cst = arith.constant dense<0.000000e+00> : vector<2x1024xf32>
    %2 = tpu.matmul %0, %1, %cst {dimension_numbers = #tpu.dot_dimension_numbers<[1], [0], [0], [1], [0, 0, 1, 1], [], []>} : vector<2x32xf32>, vector<32x1024xf32>, vector<2x1024xf32> -> vector<2x1024xf32>
    %c0_3 = arith.constant 0 : index
    %c0_4 = arith.constant 0 : index
    %3 = vector.load %arg3[%c0_3, %c0_4] : memref<1x1024xf32, #tpu.memory_space<vmem>>, vector<1x1024xf32>
    %4 = vector.broadcast %3 : vector<1x1024xf32> to vector<2x1024xf32>
    %5 = arith.addf %2, %4 : vector<2x1024xf32>
    %6 = vector.shape_cast %5 : vector<2x1024xf32> to vector<2x8x128xf32>
    %7 = vector.shape_cast %6 : vector<2x8x128xf32> to vector<16x128xf32>
    %c0_5 = arith.constant 0 : index
    %c0_6 = arith.constant 0 : index
    %8 = vector.load %arg4[%c0_5, %c0_6] : memref<384x256xf32, #tpu.memory_space<vmem>>, vector<384x256xf32>
    %c0_7 = arith.constant 0 : index
    %c0_8 = arith.constant 0 : index
    %9 = vector.load %arg5[%c0_7, %c0_8] : memref<1x256xf32, #tpu.memory_space<vmem>>, vector<1x256xf32>
    %cst_9 = arith.constant 0.000000e+00 : f32
    %10 = vector.broadcast %cst_9 : f32 to vector<1x128xf32>
    %11 = vector.extract_strided_slice %7 {offsets = [0, 0], sizes = [15, 128], strides = [1, 1]} : vector<16x128xf32> to vector<15x128xf32>
    %12 = tpu.concatenate %10, %11 in 0 : vector<1x128xf32>, vector<15x128xf32> -> vector<16x128xf32>
    %13 = tpu.iota {dimensions = array<i32: 0>} : vector<16x1xi32>
    %c8_i32 = arith.constant 8 : i32
    %c0_i32 = arith.constant 0 : i32
    %14 = arith.cmpi eq, %c8_i32, %c0_i32 : i32
    %c1_i32 = arith.constant 1 : i32
    %15 = arith.select %14, %c1_i32, %c8_i32 : i32
    %16 = vector.broadcast %15 : i32 to vector<16x1xi32>
    %17 = arith.remsi %13, %16 : vector<16x1xi32>
    %c0_i32_10 = arith.constant 0 : i32
    %18 = vector.broadcast %c0_i32_10 : i32 to vector<16x1xi32>
    %19 = arith.cmpi ne, %17, %18 : vector<16x1xi32>
    %c0_i32_11 = arith.constant 0 : i32
    %20 = vector.broadcast %c0_i32_11 : i32 to vector<16x1xi32>
    %21 = arith.cmpi slt, %17, %20 : vector<16x1xi32>
    %c0_i32_12 = arith.constant 0 : i32
    %22 = arith.cmpi slt, %15, %c0_i32_12 : i32
    %23 = vector.broadcast %22 : i1 to vector<16x1xi1>
    %24 = vector.broadcast %23 : vector<16x1xi1> to vector<16x1xi1>
    %25 = arith.xori %21, %24 : vector<16x1xi1>
    %26 = arith.andi %25, %19 : vector<16x1xi1>
    %27 = vector.broadcast %15 : i32 to vector<16x1xi32>
    %28 = arith.addi %17, %27 : vector<16x1xi32>
    %29 = arith.select %26, %28, %17 : vector<16x1xi1>, vector<16x1xi32>
    %c0_i32_13 = arith.constant 0 : i32
    %30 = vector.broadcast %c0_i32_13 : i32 to vector<16x1xi32>
    %31 = arith.cmpi eq, %29, %30 : vector<16x1xi32>
    %cst_14 = arith.constant 0.000000e+00 : f32
    %32 = vector.shape_cast %31 : vector<16x1xi1> to vector<16x1xi1>
    %33 = vector.broadcast %32 : vector<16x1xi1> to vector<16x128xi1>
    %34 = vector.broadcast %cst_14 : f32 to vector<16x128xf32>
    %35 = arith.select %33, %34, %12 : vector<16x128xi1>, vector<16x128xf32>
    %cst_15 = arith.constant 0.000000e+00 : f32
    %36 = vector.broadcast %cst_15 : f32 to vector<1x128xf32>
    %37 = vector.extract_strided_slice %7 {offsets = [1, 0], sizes = [15, 128], strides = [1, 1]} : vector<16x128xf32> to vector<15x128xf32>
    %38 = tpu.concatenate %37, %36 in 0 : vector<15x128xf32>, vector<1x128xf32> -> vector<16x128xf32>
    %39 = tpu.iota {dimensions = array<i32: 0>} : vector<16x1xi32>
    %c8_i32_16 = arith.constant 8 : i32
    %c0_i32_17 = arith.constant 0 : i32
    %40 = arith.cmpi eq, %c8_i32_16, %c0_i32_17 : i32
    %c1_i32_18 = arith.constant 1 : i32
    %41 = arith.select %40, %c1_i32_18, %c8_i32_16 : i32
    %42 = vector.broadcast %41 : i32 to vector<16x1xi32>
    %43 = arith.remsi %39, %42 : vector<16x1xi32>
    %c0_i32_19 = arith.constant 0 : i32
    %44 = vector.broadcast %c0_i32_19 : i32 to vector<16x1xi32>
    %45 = arith.cmpi ne, %43, %44 : vector<16x1xi32>
    %c0_i32_20 = arith.constant 0 : i32
    %46 = vector.broadcast %c0_i32_20 : i32 to vector<16x1xi32>
    %47 = arith.cmpi slt, %43, %46 : vector<16x1xi32>
    %c0_i32_21 = arith.constant 0 : i32
    %48 = arith.cmpi slt, %41, %c0_i32_21 : i32
    %49 = vector.broadcast %48 : i1 to vector<16x1xi1>
    %50 = vector.broadcast %49 : vector<16x1xi1> to vector<16x1xi1>
    %51 = arith.xori %47, %50 : vector<16x1xi1>
    %52 = arith.andi %51, %45 : vector<16x1xi1>
    %53 = vector.broadcast %41 : i32 to vector<16x1xi32>
    %54 = arith.addi %43, %53 : vector<16x1xi32>
    %55 = arith.select %52, %54, %43 : vector<16x1xi1>, vector<16x1xi32>
    %c7_i32 = arith.constant 7 : i32
    %56 = vector.broadcast %c7_i32 : i32 to vector<16x1xi32>
    %57 = arith.cmpi eq, %55, %56 : vector<16x1xi32>
    %cst_22 = arith.constant 0.000000e+00 : f32
    %58 = vector.shape_cast %57 : vector<16x1xi1> to vector<16x1xi1>
    %59 = vector.broadcast %58 : vector<16x1xi1> to vector<16x128xi1>
    %60 = vector.broadcast %cst_22 : f32 to vector<16x128xf32>
    %61 = arith.select %59, %60, %38 : vector<16x128xi1>, vector<16x128xf32>
    %62 = tpu.concatenate %35, %7, %61 in 1 : vector<16x128xf32>, vector<16x128xf32>, vector<16x128xf32> -> vector<16x384xf32>
    %cst_23 = arith.constant dense<0.000000e+00> : vector<16x256xf32>
    %63 = tpu.matmul %62, %8, %cst_23 {dimension_numbers = #tpu.dot_dimension_numbers<[1], [0], [0], [1], [0, 0, 1, 1], [], []>} : vector<16x384xf32>, vector<384x256xf32>, vector<16x256xf32> -> vector<16x256xf32>
    %64 = vector.broadcast %9 : vector<1x256xf32> to vector<16x256xf32>
    %65 = arith.addf %63, %64 : vector<16x256xf32>
    %66 = vector.shape_cast %65 : vector<16x256xf32> to vector<16x2x128xf32>
    %67 = vector.shape_cast %66 : vector<16x2x128xf32> to vector<32x128xf32>
    %cst_24 = arith.constant dense<0.000000e+00> : vector<128xf32>
    %68 = vector.multi_reduction <add>, %67, %cst_24 [0] : vector<32x128xf32> to vector<128xf32>
    %69 = vector.shape_cast %68 : vector<128xf32> to vector<1x128xf32>
    %70 = arith.mulf %67, %67 : vector<32x128xf32>
    %cst_25 = arith.constant dense<0.000000e+00> : vector<128xf32>
    %71 = vector.multi_reduction <add>, %70, %cst_25 [0] : vector<32x128xf32> to vector<128xf32>
    %72 = vector.shape_cast %71 : vector<128xf32> to vector<1x128xf32>
    %cst_26 = arith.constant 3.125000e-02 : f32
    %73 = vector.broadcast %cst_26 : f32 to vector<1x128xf32>
    %74 = arith.mulf %69, %73 : vector<1x128xf32>
    %cst_27 = arith.constant 3.125000e-02 : f32
    %75 = vector.broadcast %cst_27 : f32 to vector<1x128xf32>
    %76 = arith.mulf %72, %75 : vector<1x128xf32>
    %77 = arith.mulf %74, %74 : vector<1x128xf32>
    %78 = arith.subf %76, %77 : vector<1x128xf32>
    %cst_28 = arith.constant 9.99999974E-6 : f32
    %79 = vector.broadcast %cst_28 : f32 to vector<1x128xf32>
    %80 = arith.addf %78, %79 : vector<1x128xf32>
    %81 = math.rsqrt %80 : vector<1x128xf32>
    %82 = vector.broadcast %81 : vector<1x128xf32> to vector<32x128xf32>
    %83 = arith.mulf %67, %82 : vector<32x128xf32>
    %84 = arith.mulf %74, %81 : vector<1x128xf32>
    %85 = vector.broadcast %84 : vector<1x128xf32> to vector<32x128xf32>
    %86 = arith.subf %83, %85 : vector<32x128xf32>
    %cst_29 = arith.constant 0.000000e+00 : f32
    %87 = vector.broadcast %cst_29 : f32 to vector<32x128xf32>
    %88 = arith.maximumf %86, %87 : vector<32x128xf32>
    %c0_30 = arith.constant 0 : index
    %c0_31 = arith.constant 0 : index
    %89 = vector.load %arg6[%c0_30, %c0_31] : memref<384x256xf32, #tpu.memory_space<vmem>>, vector<384x256xf32>
    %c0_32 = arith.constant 0 : index
    %c0_33 = arith.constant 0 : index
    %90 = vector.load %arg7[%c0_32, %c0_33] : memref<1x256xf32, #tpu.memory_space<vmem>>, vector<1x256xf32>
    %cst_34 = arith.constant 0.000000e+00 : f32
    %91 = vector.broadcast %cst_34 : f32 to vector<1x128xf32>
    %92 = vector.extract_strided_slice %88 {offsets = [0, 0], sizes = [31, 128], strides = [1, 1]} : vector<32x128xf32> to vector<31x128xf32>
    %93 = tpu.concatenate %91, %92 in 0 : vector<1x128xf32>, vector<31x128xf32> -> vector<32x128xf32>
    %94 = tpu.iota {dimensions = array<i32: 0>} : vector<32x1xi32>
    %c16_i32 = arith.constant 16 : i32
    %c0_i32_35 = arith.constant 0 : i32
    %95 = arith.cmpi eq, %c16_i32, %c0_i32_35 : i32
    %c1_i32_36 = arith.constant 1 : i32
    %96 = arith.select %95, %c1_i32_36, %c16_i32 : i32
    %97 = vector.broadcast %96 : i32 to vector<32x1xi32>
    %98 = arith.remsi %94, %97 : vector<32x1xi32>
    %c0_i32_37 = arith.constant 0 : i32
    %99 = vector.broadcast %c0_i32_37 : i32 to vector<32x1xi32>
    %100 = arith.cmpi ne, %98, %99 : vector<32x1xi32>
    %c0_i32_38 = arith.constant 0 : i32
    %101 = vector.broadcast %c0_i32_38 : i32 to vector<32x1xi32>
    %102 = arith.cmpi slt, %98, %101 : vector<32x1xi32>
    %c0_i32_39 = arith.constant 0 : i32
    %103 = arith.cmpi slt, %96, %c0_i32_39 : i32
    %104 = vector.broadcast %103 : i1 to vector<32x1xi1>
    %105 = vector.broadcast %104 : vector<32x1xi1> to vector<32x1xi1>
    %106 = arith.xori %102, %105 : vector<32x1xi1>
    %107 = arith.andi %106, %100 : vector<32x1xi1>
    %108 = vector.broadcast %96 : i32 to vector<32x1xi32>
    %109 = arith.addi %98, %108 : vector<32x1xi32>
    %110 = arith.select %107, %109, %98 : vector<32x1xi1>, vector<32x1xi32>
    %c0_i32_40 = arith.constant 0 : i32
    %111 = vector.broadcast %c0_i32_40 : i32 to vector<32x1xi32>
    %112 = arith.cmpi eq, %110, %111 : vector<32x1xi32>
    %cst_41 = arith.constant 0.000000e+00 : f32
    %113 = vector.shape_cast %112 : vector<32x1xi1> to vector<32x1xi1>
    %114 = vector.broadcast %113 : vector<32x1xi1> to vector<32x128xi1>
    %115 = vector.broadcast %cst_41 : f32 to vector<32x128xf32>
    %116 = arith.select %114, %115, %93 : vector<32x128xi1>, vector<32x128xf32>
    %cst_42 = arith.constant 0.000000e+00 : f32
    %117 = vector.broadcast %cst_42 : f32 to vector<1x128xf32>
    %118 = vector.extract_strided_slice %88 {offsets = [1, 0], sizes = [31, 128], strides = [1, 1]} : vector<32x128xf32> to vector<31x128xf32>
    %119 = tpu.concatenate %118, %117 in 0 : vector<31x128xf32>, vector<1x128xf32> -> vector<32x128xf32>
    %120 = tpu.iota {dimensions = array<i32: 0>} : vector<32x1xi32>
    %c16_i32_43 = arith.constant 16 : i32
    %c0_i32_44 = arith.constant 0 : i32
    %121 = arith.cmpi eq, %c16_i32_43, %c0_i32_44 : i32
    %c1_i32_45 = arith.constant 1 : i32
    %122 = arith.select %121, %c1_i32_45, %c16_i32_43 : i32
    %123 = vector.broadcast %122 : i32 to vector<32x1xi32>
    %124 = arith.remsi %120, %123 : vector<32x1xi32>
    %c0_i32_46 = arith.constant 0 : i32
    %125 = vector.broadcast %c0_i32_46 : i32 to vector<32x1xi32>
    %126 = arith.cmpi ne, %124, %125 : vector<32x1xi32>
    %c0_i32_47 = arith.constant 0 : i32
    %127 = vector.broadcast %c0_i32_47 : i32 to vector<32x1xi32>
    %128 = arith.cmpi slt, %124, %127 : vector<32x1xi32>
    %c0_i32_48 = arith.constant 0 : i32
    %129 = arith.cmpi slt, %122, %c0_i32_48 : i32
    %130 = vector.broadcast %129 : i1 to vector<32x1xi1>
    %131 = vector.broadcast %130 : vector<32x1xi1> to vector<32x1xi1>
    %132 = arith.xori %128, %131 : vector<32x1xi1>
    %133 = arith.andi %132, %126 : vector<32x1xi1>
    %134 = vector.broadcast %122 : i32 to vector<32x1xi32>
    %135 = arith.addi %124, %134 : vector<32x1xi32>
    %136 = arith.select %133, %135, %124 : vector<32x1xi1>, vector<32x1xi32>
    %c15_i32 = arith.constant 15 : i32
    %137 = vector.broadcast %c15_i32 : i32 to vector<32x1xi32>
    %138 = arith.cmpi eq, %136, %137 : vector<32x1xi32>
    %cst_49 = arith.constant 0.000000e+00 : f32
    %139 = vector.shape_cast %138 : vector<32x1xi1> to vector<32x1xi1>
    %140 = vector.broadcast %139 : vector<32x1xi1> to vector<32x128xi1>
    %141 = vector.broadcast %cst_49 : f32 to vector<32x128xf32>
    %142 = arith.select %140, %141, %119 : vector<32x128xi1>, vector<32x128xf32>
    %143 = tpu.concatenate %116, %88, %142 in 1 : vector<32x128xf32>, vector<32x128xf32>, vector<32x128xf32> -> vector<32x384xf32>
    %cst_50 = arith.constant dense<0.000000e+00> : vector<32x256xf32>
    %144 = tpu.matmul %143, %89, %cst_50 {dimension_numbers = #tpu.dot_dimension_numbers<[1], [0], [0], [1], [0, 0, 1, 1], [], []>} : vector<32x384xf32>, vector<384x256xf32>, vector<32x256xf32> -> vector<32x256xf32>
    %145 = vector.broadcast %90 : vector<1x256xf32> to vector<32x256xf32>
    %146 = arith.addf %144, %145 : vector<32x256xf32>
    %147 = vector.shape_cast %146 : vector<32x256xf32> to vector<32x2x128xf32>
    %148 = vector.shape_cast %147 : vector<32x2x128xf32> to vector<64x128xf32>
    %cst_51 = arith.constant dense<0.000000e+00> : vector<128xf32>
    %149 = vector.multi_reduction <add>, %148, %cst_51 [0] : vector<64x128xf32> to vector<128xf32>
    %150 = vector.shape_cast %149 : vector<128xf32> to vector<1x128xf32>
    %151 = arith.mulf %148, %148 : vector<64x128xf32>
    %cst_52 = arith.constant dense<0.000000e+00> : vector<128xf32>
    %152 = vector.multi_reduction <add>, %151, %cst_52 [0] : vector<64x128xf32> to vector<128xf32>
    %153 = vector.shape_cast %152 : vector<128xf32> to vector<1x128xf32>
    %cst_53 = arith.constant 1.562500e-02 : f32
    %154 = vector.broadcast %cst_53 : f32 to vector<1x128xf32>
    %155 = arith.mulf %150, %154 : vector<1x128xf32>
    %cst_54 = arith.constant 1.562500e-02 : f32
    %156 = vector.broadcast %cst_54 : f32 to vector<1x128xf32>
    %157 = arith.mulf %153, %156 : vector<1x128xf32>
    %158 = arith.mulf %155, %155 : vector<1x128xf32>
    %159 = arith.subf %157, %158 : vector<1x128xf32>
    %cst_55 = arith.constant 9.99999974E-6 : f32
    %160 = vector.broadcast %cst_55 : f32 to vector<1x128xf32>
    %161 = arith.addf %159, %160 : vector<1x128xf32>
    %162 = math.rsqrt %161 : vector<1x128xf32>
    %163 = vector.broadcast %162 : vector<1x128xf32> to vector<64x128xf32>
    %164 = arith.mulf %148, %163 : vector<64x128xf32>
    %165 = arith.mulf %155, %162 : vector<1x128xf32>
    %166 = vector.broadcast %165 : vector<1x128xf32> to vector<64x128xf32>
    %167 = arith.subf %164, %166 : vector<64x128xf32>
    %cst_56 = arith.constant 0.000000e+00 : f32
    %168 = vector.broadcast %cst_56 : f32 to vector<64x128xf32>
    %169 = arith.maximumf %167, %168 : vector<64x128xf32>
    %cst_57 = arith.constant 0.000000e+00 : f32
    %170 = vector.broadcast %cst_57 : f32 to vector<1x128xf32>
    %171 = vector.extract_strided_slice %169 {offsets = [0, 0], sizes = [63, 128], strides = [1, 1]} : vector<64x128xf32> to vector<63x128xf32>
    %172 = tpu.concatenate %170, %171 in 0 : vector<1x128xf32>, vector<63x128xf32> -> vector<64x128xf32>
    %173 = tpu.iota {dimensions = array<i32: 0>} : vector<64x1xi32>
    %c32_i32 = arith.constant 32 : i32
    %c0_i32_58 = arith.constant 0 : i32
    %174 = arith.cmpi eq, %c32_i32, %c0_i32_58 : i32
    %c1_i32_59 = arith.constant 1 : i32
    %175 = arith.select %174, %c1_i32_59, %c32_i32 : i32
    %176 = vector.broadcast %175 : i32 to vector<64x1xi32>
    %177 = arith.remsi %173, %176 : vector<64x1xi32>
    %c0_i32_60 = arith.constant 0 : i32
    %178 = vector.broadcast %c0_i32_60 : i32 to vector<64x1xi32>
    %179 = arith.cmpi ne, %177, %178 : vector<64x1xi32>
    %c0_i32_61 = arith.constant 0 : i32
    %180 = vector.broadcast %c0_i32_61 : i32 to vector<64x1xi32>
    %181 = arith.cmpi slt, %177, %180 : vector<64x1xi32>
    %c0_i32_62 = arith.constant 0 : i32
    %182 = arith.cmpi slt, %175, %c0_i32_62 : i32
    %183 = vector.broadcast %182 : i1 to vector<64x1xi1>
    %184 = vector.broadcast %183 : vector<64x1xi1> to vector<64x1xi1>
    %185 = arith.xori %181, %184 : vector<64x1xi1>
    %186 = arith.andi %185, %179 : vector<64x1xi1>
    %187 = vector.broadcast %175 : i32 to vector<64x1xi32>
    %188 = arith.addi %177, %187 : vector<64x1xi32>
    %189 = arith.select %186, %188, %177 : vector<64x1xi1>, vector<64x1xi32>
    %c0_i32_63 = arith.constant 0 : i32
    %190 = vector.broadcast %c0_i32_63 : i32 to vector<64x1xi32>
    %191 = arith.cmpi eq, %189, %190 : vector<64x1xi32>
    %cst_64 = arith.constant 0.000000e+00 : f32
    %192 = vector.shape_cast %191 : vector<64x1xi1> to vector<64x1xi1>
    %193 = vector.broadcast %192 : vector<64x1xi1> to vector<64x128xi1>
    %194 = vector.broadcast %cst_64 : f32 to vector<64x128xf32>
    %195 = arith.select %193, %194, %172 : vector<64x128xi1>, vector<64x128xf32>
    %cst_65 = arith.constant 0.000000e+00 : f32
    %196 = vector.broadcast %cst_65 : f32 to vector<1x128xf32>
    %197 = vector.extract_strided_slice %169 {offsets = [1, 0], sizes = [63, 128], strides = [1, 1]} : vector<64x128xf32> to vector<63x128xf32>
    %198 = tpu.concatenate %197, %196 in 0 : vector<63x128xf32>, vector<1x128xf32> -> vector<64x128xf32>
    %199 = tpu.iota {dimensions = array<i32: 0>} : vector<64x1xi32>
    %c32_i32_66 = arith.constant 32 : i32
    %c0_i32_67 = arith.constant 0 : i32
    %200 = arith.cmpi eq, %c32_i32_66, %c0_i32_67 : i32
    %c1_i32_68 = arith.constant 1 : i32
    %201 = arith.select %200, %c1_i32_68, %c32_i32_66 : i32
    %202 = vector.broadcast %201 : i32 to vector<64x1xi32>
    %203 = arith.remsi %199, %202 : vector<64x1xi32>
    %c0_i32_69 = arith.constant 0 : i32
    %204 = vector.broadcast %c0_i32_69 : i32 to vector<64x1xi32>
    %205 = arith.cmpi ne, %203, %204 : vector<64x1xi32>
    %c0_i32_70 = arith.constant 0 : i32
    %206 = vector.broadcast %c0_i32_70 : i32 to vector<64x1xi32>
    %207 = arith.cmpi slt, %203, %206 : vector<64x1xi32>
    %c0_i32_71 = arith.constant 0 : i32
    %208 = arith.cmpi slt, %201, %c0_i32_71 : i32
    %209 = vector.broadcast %208 : i1 to vector<64x1xi1>
    %210 = vector.broadcast %209 : vector<64x1xi1> to vector<64x1xi1>
    %211 = arith.xori %207, %210 : vector<64x1xi1>
    %212 = arith.andi %211, %205 : vector<64x1xi1>
    %213 = vector.broadcast %201 : i32 to vector<64x1xi32>
    %214 = arith.addi %203, %213 : vector<64x1xi32>
    %215 = arith.select %212, %214, %203 : vector<64x1xi1>, vector<64x1xi32>
    %c31_i32 = arith.constant 31 : i32
    %216 = vector.broadcast %c31_i32 : i32 to vector<64x1xi32>
    %217 = arith.cmpi eq, %215, %216 : vector<64x1xi32>
    %cst_72 = arith.constant 0.000000e+00 : f32
    %218 = vector.shape_cast %217 : vector<64x1xi1> to vector<64x1xi1>
    %219 = vector.broadcast %218 : vector<64x1xi1> to vector<64x128xi1>
    %220 = vector.broadcast %cst_72 : f32 to vector<64x128xf32>
    %221 = arith.select %219, %220, %198 : vector<64x128xi1>, vector<64x128xf32>
    %222 = tpu.concatenate %195, %169, %221 in 1 : vector<64x128xf32>, vector<64x128xf32>, vector<64x128xf32> -> vector<64x384xf32>
    %c0_73 = arith.constant 0 : index
    %c0_74 = arith.constant 0 : index
    %223 = vector.load %arg8[%c0_73, %c0_74] : memref<384x128xf32, #tpu.memory_space<vmem>>, vector<384x128xf32>
    %cst_75 = arith.constant dense<0.000000e+00> : vector<64x128xf32>
    %224 = tpu.matmul %222, %223, %cst_75 {dimension_numbers = #tpu.dot_dimension_numbers<[1], [0], [0], [1], [0, 0, 1, 1], [], []>} : vector<64x384xf32>, vector<384x128xf32>, vector<64x128xf32> -> vector<64x128xf32>
    %c0_76 = arith.constant 0 : index
    %c0_77 = arith.constant 0 : index
    %225 = vector.load %arg9[%c0_76, %c0_77] : memref<1x128xf32, #tpu.memory_space<vmem>>, vector<1x128xf32>
    %226 = vector.broadcast %225 : vector<1x128xf32> to vector<64x128xf32>
    %227 = arith.addf %224, %226 : vector<64x128xf32>
    %228 = vector.shape_cast %227 : vector<64x128xf32> to vector<2x32x128xf32>
    %c0_78 = arith.constant 0 : index
    %c0_79 = arith.constant 0 : index
    %c0_80 = arith.constant 0 : index
    %229 = vector.load %arg10[%c0_78, %c0_79, %c0_80] : memref<2x32x128xf32, #tpu.memory_space<vmem>>, vector<2x32x128xf32>
    tpu.vector_store %arg10[%c0_78, %c0_79, %c0_80], %228 {strides = array<i32>} : memref<2x32x128xf32, #tpu.memory_space<vmem>>, vector<2x32x128xf32>,
    return
  }
  func.func @transform_0(%arg0: i32) -> (i32, i32) {
    %c0_i32 = arith.constant 0 : i32
    %c0_i32_0 = arith.constant 0 : i32
    %c0_i32_1 = arith.constant 0 : i32
    return %c0_i32, %c0_i32_0 : i32, i32
  }
  func.func @transform_1(%arg0: i32) -> (i32, i32) {
    %c0_i32 = arith.constant 0 : i32
    %c0_i32_0 = arith.constant 0 : i32
    %c0_i32_1 = arith.constant 0 : i32
    return %c0_i32, %c0_i32_0 : i32, i32
  }
  func.func @transform_2(%arg0: i32) -> (i32, i32) {
    %c0_i32 = arith.constant 0 : i32
    %c0_i32_0 = arith.constant 0 : i32
    %c0_i32_1 = arith.constant 0 : i32
    return %c0_i32, %c0_i32_0 : i32, i32
  }
  func.func @transform_3(%arg0: i32) -> (i32, i32) {
    %c0_i32 = arith.constant 0 : i32
    %c0_i32_0 = arith.constant 0 : i32
    %c0_i32_1 = arith.constant 0 : i32
    return %c0_i32, %c0_i32_0 : i32, i32
  }
  func.func @transform_4(%arg0: i32) -> (i32, i32) {
    %c0_i32 = arith.constant 0 : i32
    %c0_i32_0 = arith.constant 0 : i32
    %c0_i32_1 = arith.constant 0 : i32
    return %c0_i32, %c0_i32_0 : i32, i32
  }
  func.func @transform_5(%arg0: i32) -> (i32, i32) {
    %c0_i32 = arith.constant 0 : i32
    %c0_i32_0 = arith.constant 0 : i32
    %c0_i32_1 = arith.constant 0 : i32
    return %c0_i32, %c0_i32_0 : i32, i32
  }
  func.func @transform_6(%arg0: i32) -> (i32, i32) {
    %c0_i32 = arith.constant 0 : i32
    %c0_i32_0 = arith.constant 0 : i32
    %c0_i32_1 = arith.constant 0 : i32
    return %c0_i32, %c0_i32_0 : i32, i32
  }
  func.func @transform_7(%arg0: i32) -> (i32, i32) {
    %c0_i32 = arith.constant 0 : i32
    %c0_i32_0 = arith.constant 0 : i32
    %c0_i32_1 = arith.constant 0 : i32
    return %c0_i32, %c0_i32_0 : i32, i32
  }
  func.func @transform_8(%arg0: i32) -> (i32, i32) {
    %c0_i32 = arith.constant 0 : i32
    %c0_i32_0 = arith.constant 0 : i32
    %c0_i32_1 = arith.constant 0 : i32
    return %c0_i32, %c0_i32_0 : i32, i32
  }
  func.func @transform_9(%arg0: i32) -> (i32, i32, i32) {
    %c0_i32 = arith.constant 0 : i32
    %c0_i32_0 = arith.constant 0 : i32
    %c0_i32_1 = arith.constant 0 : i32
    %c0_i32_2 = arith.constant 0 : i32
    return %c0_i32, %c0_i32_0, %c0_i32_1 : i32, i32, i32
  }
}

</mosaic_0001>

<llo_original>
// kernel: tpu_custom_call.1
$region0: #{tpu_custom_call.1}
  #allocation0 [shape = 'u32[]', space=smem, size = 0x4, offset = 0x4, fixed_abs, tag = 'smem constant byte address 0x4 - core index']
  #allocation1 [shape = 'u32[72,128]{1,0:T(1,128)}', space=vmem, size = 0x9000, scoped, tag = 'internal scratch']
  %s0 = inlined_call_operand.hbm [shape: f32[2,32], index: 0, kind: input, shape index: {}]
  %s1 = inlined_call_operand.hbm [shape: f32[32,1024], index: 1, kind: input, shape index: {}]
  %s2 = inlined_call_operand.hbm [shape: f32[1,1024], index: 2, kind: input, shape index: {}]
  %s3 = inlined_call_operand.hbm [shape: f32[384,256], index: 3, kind: input, shape index: {}]
  %s4 = inlined_call_operand.vmem [shape: f32[1,256], index: 4, kind: input, shape index: {}]
  %s5 = inlined_call_operand.hbm [shape: f32[384,256], index: 5, kind: input, shape index: {}]
  %s6 = inlined_call_operand.vmem [shape: f32[1,256], index: 6, kind: input, shape index: {}]
  %s7 = inlined_call_operand.hbm [shape: f32[384,128], index: 7, kind: input, shape index: {}]
  %s8 = inlined_call_operand.vmem [shape: f32[1,128], index: 8, kind: input, shape index: {}]
  %s9 = inlined_call_operand.hbm [shape: f32[2,32,128], index: 9, kind: output, shape index: {}]
  %s10 = sld [smem:[#allocation0]]
  $region70: #{tpu_custom_call.1} parent=0
    _
  %s12 = ssub.s32 1, %s10
  %s13 = scalar_select 0, %s12, %s10
  $region1: #{tpu_custom_call.1} parent=0
    #allocation2 [shape = 'u8[1024]{0}', space=vmem, size = 0x400, scoped, tag = 'input window, operand 0, single buffered']
    #allocation3 [shape = 's32[1]{0}', space=sflag, size = 0x4, scoped, tag = 'scoped memory for tpu_custom_call.1']
    #allocation4 [shape = 's32[1]{0}', space=sflag, size = 0x4, scoped, tag = 'scoped memory for tpu_custom_call.1']
    #allocation5 [shape = 'u8[131072]{0}', space=vmem, size = 0x20000, scoped, tag = 'input window, operand 1, single buffered']
    #allocation6 [shape = 's32[1]{0}', space=sflag, size = 0x4, scoped, tag = 'scoped memory for tpu_custom_call.1']
    #allocation7 [shape = 'u8[4096]{0}', space=vmem, size = 0x1000, scoped, tag = 'input window, operand 2, single buffered']
    #allocation8 [shape = 'u8[393216]{0}', space=vmem, size = 0x60000, scoped, tag = 'input window, operand 3, single buffered']
    #allocation9 [shape = 's32[1]{0}', space=sflag, size = 0x4, scoped, tag = 'scoped memory for tpu_custom_call.1']
    #allocation10 [shape = 'u8[393216]{0}', space=vmem, size = 0x60000, scoped, tag = 'input window, operand 5, single buffered']
    #allocation11 [shape = 'u8[196608]{0}', space=vmem, size = 0x30000, scoped, tag = 'input window, operand 7, single buffered']
    #allocation12 [shape = 's32[1]{0}', space=sflag, size = 0x4, scoped, tag = 'scoped memory for tpu_custom_call.1']
    #allocation13 [shape = 'u8[32768]{0}', space=vmem, size = 0x8000, scoped, tag = 'output window, operand 0, single buffered']
    %14 = vsyncpa [#allocation3], 0
    %15 = vsyncpa [#allocation6], 0
    %16 = vsyncpa [#allocation9], 0
    %17 = vsyncpa [#allocation12], 0
    %18 = vsyncpa [#allocation4], 0
    // Predicated region
    $region2: #{tpu_custom_call.1} parent=1 // pred_check
      _
    $region3: #{tpu_custom_call.1} parent=1 // pred_check_branch
      %20 = sbr.rel (0) target = $region5
    $region4: #{tpu_custom_call.1} parent=1 // pred_region
      %22 = vsyncadd [#allocation3], 0
      %s24 = sshll.u32 %s0, 4
      %s25 = int_to_ptr.hbm [resolvable:$true] %s24
      %s26 = sshll.u32 [#allocation2], 4
      %s27 = int_to_ptr.vmem [resolvable:$true] %s26
      %29 = dma.hbm_to_vmem [thread:$0]  %s25, 32, %s27, [#allocation3]
    $region5: #{tpu_custom_call.1} parent=1 // pred_fallthru
      _
    // Predicated region
    $region6: #{tpu_custom_call.1} parent=1 // pred_check
      _
    $region7: #{tpu_custom_call.1} parent=1 // pred_check_branch
      %31 = sbr.rel (0) target = $region9
    $region8: #{tpu_custom_call.1} parent=1 // pred_region
      %33 = vsyncadd [#allocation6], 0
      %s34 = sshll.u32 %s1, 4
      %s35 = int_to_ptr.hbm [resolvable:$true] %s34
      %s36 = sshll.u32 [#allocation5], 4
      %s37 = int_to_ptr.vmem [resolvable:$true] %s36
      %42 = dma.hbm_to_vmem [thread:$0]  %s35, 4096, %s37, [#allocation6], 1024, 1024, 64
    $region9: #{tpu_custom_call.1} parent=1 // pred_fallthru
      _
    // Predicated region
    $region10: #{tpu_custom_call.1} parent=1 // pred_check
      _
    $region11: #{tpu_custom_call.1} parent=1 // pred_check_branch
      %44 = sbr.rel (0) target = $region13
    $region12: #{tpu_custom_call.1} parent=1 // pred_region
      %46 = vsyncadd [#allocation6], 0
      %s48 = sshll.u32 %s2, 4
      %s49 = int_to_ptr.hbm [resolvable:$true] %s48
      %s50 = sshll.u32 [#allocation7], 4
      %s51 = int_to_ptr.vmem [resolvable:$true] %s50
      %53 = dma.hbm_to_vmem [thread:$0]  %s49, 128, %s51, [#allocation6]
    $region13: #{tpu_custom_call.1} parent=1 // pred_fallthru
      _
    // Predicated region
    $region14: #{tpu_custom_call.1} parent=1 // pred_check
      _
    $region15: #{tpu_custom_call.1} parent=1 // pred_check_branch
      %55 = sbr.rel (0) target = $region17
    $region16: #{tpu_custom_call.1} parent=1 // pred_region
      %57 = vsyncadd [#allocation9], 0
      %s58 = sshll.u32 %s3, 4
      %s59 = int_to_ptr.hbm [resolvable:$true] %s58
      %s60 = sshll.u32 [#allocation8], 4
      %s61 = int_to_ptr.vmem [resolvable:$true] %s60
      %66 = dma.hbm_to_vmem [thread:$0]  %s59, 12288, %s61, [#allocation9], 256, 256, 16
    $region17: #{tpu_custom_call.1} parent=1 // pred_fallthru
      _
    // Predicated region
    $region18: #{tpu_custom_call.1} parent=1 // pred_check
      _
    $region19: #{tpu_custom_call.1} parent=1 // pred_check_branch
      %68 = sbr.rel (0) target = $region21
    $region20: #{tpu_custom_call.1} parent=1 // pred_region
      _
    $region21: #{tpu_custom_call.1} parent=1 // pred_fallthru
      _
    // Predicated region
    $region22: #{tpu_custom_call.1} parent=1 // pred_check
      _
    $region23: #{tpu_custom_call.1} parent=1 // pred_check_branch
      %70 = sbr.rel (0) target = $region25
    $region24: #{tpu_custom_call.1} parent=1 // pred_region
      %72 = vsyncadd [#allocation9], 0
      %s73 = sshll.u32 %s5, 4
      %s74 = int_to_ptr.hbm [resolvable:$true] %s73
      %s75 = sshll.u32 [#allocation10], 4
      %s76 = int_to_ptr.vmem [resolvable:$true] %s75
      %81 = dma.hbm_to_vmem [thread:$0]  %s74, 12288, %s76, [#allocation9], 256, 256, 16
    $region25: #{tpu_custom_call.1} parent=1 // pred_fallthru
      _
    // Predicated region
    $region26: #{tpu_custom_call.1} parent=1 // pred_check
      _
    $region27: #{tpu_custom_call.1} parent=1 // pred_check_branch
      %83 = sbr.rel (0) target = $region29
    $region28: #{tpu_custom_call.1} parent=1 // pred_region
      _
    $region29: #{tpu_custom_call.1} parent=1 // pred_fallthru
      _
    // Predicated region
    $region30: #{tpu_custom_call.1} parent=1 // pred_check
      _
    $region31: #{tpu_custom_call.1} parent=1 // pred_check_branch
      %85 = sbr.rel (0) target = $region33
    $region32: #{tpu_custom_call.1} parent=1 // pred_region
      %87 = vsyncadd [#allocation12], 0
      %s88 = sshll.u32 %s7, 4
      %s89 = int_to_ptr.hbm [resolvable:$true] %s88
      %s90 = sshll.u32 [#allocation11], 4
      %s91 = int_to_ptr.vmem [resolvable:$true] %s90
      %96 = dma.hbm_to_vmem [thread:$0]  %s89, 6144, %s91, [#allocation12], 128, 128, 8
    $region33: #{tpu_custom_call.1} parent=1 // pred_fallthru
      _
    // Predicated region
    $region34: #{tpu_custom_call.1} parent=1 // pred_check
      _
    $region35: #{tpu_custom_call.1} parent=1 // pred_check_branch
      %98 = sbr.rel (0) target = $region37
    $region36: #{tpu_custom_call.1} parent=1 // pred_region
      _
    $region37: #{tpu_custom_call.1} parent=1 // pred_fallthru
      _
    // Predicated region
    $region38: #{tpu_custom_call.1} parent=1 // pred_check
      _
    $region39: #{tpu_custom_call.1} parent=1 // pred_check_branch
      %100 = sbr.rel (0) target = $region41
    $region40: #{tpu_custom_call.1} parent=1 // pred_region
      %102 = dma.done [#allocation3], 32
    $region41: #{tpu_custom_call.1} parent=1 // pred_fallthru
      _
    // Predicated region
    $region42: #{tpu_custom_call.1} parent=1 // pred_check
      _
    $region43: #{tpu_custom_call.1} parent=1 // pred_check_branch
      %104 = sbr.rel (0) target = $region45
    $region44: #{tpu_custom_call.1} parent=1 // pred_region
      %106 = dma.done [#allocation6], 4096
    $region45: #{tpu_custom_call.1} parent=1 // pred_fallthru
      _
    // Predicated region
    $region46: #{tpu_custom_call.1} parent=1 // pred_check
      _
    $region47: #{tpu_custom_call.1} parent=1 // pred_check_branch
      %108 = sbr.rel (0) target = $region49
    $region48: #{tpu_custom_call.1} parent=1 // pred_region
      %110 = dma.done [#allocation6], 128
    $region49: #{tpu_custom_call.1} parent=1 // pred_fallthru
      _
    // Predicated region
    $region50: #{tpu_custom_call.1} parent=1 // pred_check
      _
    $region51: #{tpu_custom_call.1} parent=1 // pred_check_branch
      %112 = sbr.rel (0) target = $region53
    $region52: #{tpu_custom_call.1} parent=1 // pred_region
      %114 = dma.done [#allocation9], 12288
    $region53: #{tpu_custom_call.1} parent=1 // pred_fallthru
      _
    // Predicated region
    $region54: #{tpu_custom_call.1} parent=1 // pred_check
      _
    $region55: #{tpu_custom_call.1} parent=1 // pred_check_branch
      %116 = sbr.rel (0) target = $region57
    $region56: #{tpu_custom_call.1} parent=1 // pred_region
      %118 = dma.done [#allocation9], 12288
    $region57: #{tpu_custom_call.1} parent=1 // pred_fallthru
      _
    // Predicated region
    $region58: #{tpu_custom_call.1} parent=1 // pred_check
      _
    $region59: #{tpu_custom_call.1} parent=1 // pred_check_branch
      %120 = sbr.rel (0) target = $region61
    $region60: #{tpu_custom_call.1} parent=1 // pred_region
      %122 = dma.done [#allocation12], 6144
    $region61: #{tpu_custom_call.1} parent=1 // pred_fallthru
      _
    %v123 = vld [vmem:[#allocation2] sm:$0x3]
    %v124 = vld [vmem:[#allocation5] sm:$0xff]
    %v125 = vld [vmem:[#allocation5 + $0x8] sm:$0xff]
    %v126 = vld [vmem:[#allocation5 + $0x10] sm:$0xff]
    %v127 = vld [vmem:[#allocation5 + $0x18] sm:$0xff]
    %v128 = vld [vmem:[#allocation5 + $0x20] sm:$0xff]
    %v129 = vld [vmem:[#allocation5 + $0x28] sm:$0xff]
    %v130 = vld [vmem:[#allocation5 + $0x30] sm:$0xff]
    %v131 = vld [vmem:[#allocation5 + $0x38] sm:$0xff]
    %v132 = vld [vmem:[#allocation5 + $0x40] sm:$0xff]
    %v133 = vld [vmem:[#allocation5 + $0x48] sm:$0xff]
    %v134 = vld [vmem:[#allocation5 + $0x50] sm:$0xff]
    %v135 = vld [vmem:[#allocation5 + $0x58] sm:$0xff]
    %v136 = vld [vmem:[#allocation5 + $0x60] sm:$0xff]
    %v137 = vld [vmem:[#allocation5 + $0x68] sm:$0xff]
    %v138 = vld [vmem:[#allocation5 + $0x70] sm:$0xff]
    %v139 = vld [vmem:[#allocation5 + $0x78] sm:$0xff]
    %v140 = vld [vmem:[#allocation5 + $0x80] sm:$0xff]
    %v141 = vld [vmem:[#allocation5 + $0x88] sm:$0xff]
    %v142 = vld [vmem:[#allocation5 + $0x90] sm:$0xff]
    %v143 = vld [vmem:[#allocation5 + $0x98] sm:$0xff]
    %v144 = vld [vmem:[#allocation5 + $0xa0] sm:$0xff]
    %v145 = vld [vmem:[#allocation5 + $0xa8] sm:$0xff]
    %v146 = vld [vmem:[#allocation5 + $0xb0] sm:$0xff]
    %v147 = vld [vmem:[#allocation5 + $0xb8] sm:$0xff]
    %v148 = vld [vmem:[#allocation5 + $0xc0] sm:$0xff]
    %v149 = vld [vmem:[#allocation5 + $0xc8] sm:$0xff]
    %v150 = vld [vmem:[#allocation5 + $0xd0] sm:$0xff]
    %v151 = vld [vmem:[#allocation5 + $0xd8] sm:$0xff]
    %v152 = vld [vmem:[#allocation5 + $0xe0] sm:$0xff]
    %v153 = vld [vmem:[#allocation5 + $0xe8] sm:$0xff]
    %v154 = vld [vmem:[#allocation5 + $0xf0] sm:$0xff]
    %v155 = vld [vmem:[#allocation5 + $0xf8] sm:$0xff]
    %v156 = vld [vmem:[#allocation7] sm:$0xff]
    %v158 = vperm.slane %v156, 0
    %v159 = vperm.slane %v156, 1
    %v160 = vperm.slane %v156, 2
    %v161 = vperm.slane %v156, 3
    %v162 = vperm.slane %v156, 4
    %v163 = vperm.slane %v156, 5
    %v164 = vperm.slane %v156, 6
    %v165 = vperm.slane %v156, 7
    %vm174 = vcmask 261120
    %v176 = vsel %vm174, %v123, 0
    %178 = vmatpush.msra.mxu0 0.0
    %179 = vmatpush.msra.mxu0 0.0
    %180 = vmatpush.msra.mxu0 0.0
    %181 = vmatpush.msra.mxu0 0.0
    %182 = vmatpush.msra.mxu0 0.0
    %183 = vmatpush.msra.mxu0 0.0
    %184 = vmatpush.msra.mxu0 0.0
    %185 = vmatpush.msra.mxu0 0.0
    %186 = vmatpush.msra.mxu0 0.0
    %187 = vmatpush.msra.mxu0 0.0
    %188 = vmatpush.msra.mxu0 0.0
    %189 = vmatpush.msra.mxu0 0.0
    %190 = vmatpush.msra.mxu0 %v148
    %191 = vmatpush.msra.mxu0 %v140
    %192 = vmatpush.msra.mxu0 %v132
    %193 = vmatpush.msra.mxu0 %v124
    %194 = vmatmul.f32.gmra.mxu0 %v176
    %v195 = vpop.f32.mrf.mxu0
    %v196 = vadd.f32 %v158, %v195
    %197 = vdwg.mxu0
    %198 = vmatpush.msra.mxu0 0.0
    %199 = vmatpush.msra.mxu0 0.0
    %200 = vmatpush.msra.mxu0 0.0
    %201 = vmatpush.msra.mxu0 0.0
    %202 = vmatpush.msra.mxu0 0.0
    %203 = vmatpush.msra.mxu0 0.0
    %204 = vmatpush.msra.mxu0 0.0
    %205 = vmatpush.msra.mxu0 0.0
    %206 = vmatpush.msra.mxu0 0.0
    %207 = vmatpush.msra.mxu0 0.0
    %208 = vmatpush.msra.mxu0 0.0
    %209 = vmatpush.msra.mxu0 0.0
    %210 = vmatpush.msra.mxu0 %v149
    %211 = vmatpush.msra.mxu0 %v141
    %212 = vmatpush.msra.mxu0 %v133
    %213 = vmatpush.msra.mxu0 %v125
    %214 = vmatmul.f32.gmra.mxu0 %v176
    %v215 = vpop.f32.mrf.mxu0
    %v216 = vadd.f32 %v159, %v215
    %217 = vdwg.mxu0
    %218 = vmatpush.msra.mxu0 0.0
    %219 = vmatpush.msra.mxu0 0.0
    %220 = vmatpush.msra.mxu0 0.0
    %221 = vmatpush.msra.mxu0 0.0
    %222 = vmatpush.msra.mxu0 0.0
    %223 = vmatpush.msra.mxu0 0.0
    %224 = vmatpush.msra.mxu0 0.0
    %225 = vmatpush.msra.mxu0 0.0
    %226 = vmatpush.msra.mxu0 0.0
    %227 = vmatpush.msra.mxu0 0.0
    %228 = vmatpush.msra.mxu0 0.0
    %229 = vmatpush.msra.mxu0 0.0
    %230 = vmatpush.msra.mxu0 %v150
    %231 = vmatpush.msra.mxu0 %v142
    %232 = vmatpush.msra.mxu0 %v134
    %233 = vmatpush.msra.mxu0 %v126
    %234 = vmatmul.f32.gmra.mxu0 %v176
    %v235 = vpop.f32.mrf.mxu0
    %v236 = vadd.f32 %v160, %v235
    %237 = vdwg.mxu0
    %238 = vmatpush.msra.mxu0 0.0
    %239 = vmatpush.msra.mxu0 0.0
    %240 = vmatpush.msra.mxu0 0.0
    %241 = vmatpush.msra.mxu0 0.0
    %242 = vmatpush.msra.mxu0 0.0
    %243 = vmatpush.msra.mxu0 0.0
    %244 = vmatpush.msra.mxu0 0.0
    %245 = vmatpush.msra.mxu0 0.0
    %246 = vmatpush.msra.mxu0 0.0
    %247 = vmatpush.msra.mxu0 0.0
    %248 = vmatpush.msra.mxu0 0.0
    %249 = vmatpush.msra.mxu0 0.0
    %250 = vmatpush.msra.mxu0 %v151
    %251 = vmatpush.msra.mxu0 %v143
    %252 = vmatpush.msra.mxu0 %v135
    %253 = vmatpush.msra.mxu0 %v127
    %254 = vmatmul.f32.gmra.mxu0 %v176
    %v255 = vpop.f32.mrf.mxu0
    %v256 = vadd.f32 %v161, %v255
    %257 = vdwg.mxu0
    %258 = vmatpush.msra.mxu0 0.0
    %259 = vmatpush.msra.mxu0 0.0
    %260 = vmatpush.msra.mxu0 0.0
    %261 = vmatpush.msra.mxu0 0.0
    %262 = vmatpush.msra.mxu0 0.0
    %263 = vmatpush.msra.mxu0 0.0
    %264 = vmatpush.msra.mxu0 0.0
    %265 = vmatpush.msra.mxu0 0.0
    %266 = vmatpush.msra.mxu0 0.0
    %267 = vmatpush.msra.mxu0 0.0
    %268 = vmatpush.msra.mxu0 0.0
    %269 = vmatpush.msra.mxu0 0.0
    %270 = vmatpush.msra.mxu0 %v152
    %271 = vmatpush.msra.mxu0 %v144
    %272 = vmatpush.msra.mxu0 %v136
    %273 = vmatpush.msra.mxu0 %v128
    %274 = vmatmul.f32.gmra.mxu0 %v176
    %v275 = vpop.f32.mrf.mxu0
    %v276 = vadd.f32 %v162, %v275
    %277 = vdwg.mxu0
    %278 = vmatpush.msra.mxu0 0.0
    %279 = vmatpush.msra.mxu0 0.0
    %280 = vmatpush.msra.mxu0 0.0
    %281 = vmatpush.msra.mxu0 0.0
    %282 = vmatpush.msra.mxu0 0.0
    %283 = vmatpush.msra.mxu0 0.0
    %284 = vmatpush.msra.mxu0 0.0
    %285 = vmatpush.msra.mxu0 0.0
    %286 = vmatpush.msra.mxu0 0.0
    %287 = vmatpush.msra.mxu0 0.0
    %288 = vmatpush.msra.mxu0 0.0
    %289 = vmatpush.msra.mxu0 0.0
    %290 = vmatpush.msra.mxu0 %v153
    %291 = vmatpush.msra.mxu0 %v145
    %292 = vmatpush.msra.mxu0 %v137
    %293 = vmatpush.msra.mxu0 %v129
    %294 = vmatmul.f32.gmra.mxu0 %v176
    %v295 = vpop.f32.mrf.mxu0
    %v296 = vadd.f32 %v163, %v295
    %297 = vdwg.mxu0
    %298 = vmatpush.msra.mxu0 0.0
    %299 = vmatpush.msra.mxu0 0.0
    %300 = vmatpush.msra.mxu0 0.0
    %301 = vmatpush.msra.mxu0 0.0
    %302 = vmatpush.msra.mxu0 0.0
    %303 = vmatpush.msra.mxu0 0.0
    %304 = vmatpush.msra.mxu0 0.0
    %305 = vmatpush.msra.mxu0 0.0
    %306 = vmatpush.msra.mxu0 0.0
    %307 = vmatpush.msra.mxu0 0.0
    %308 = vmatpush.msra.mxu0 0.0
    %309 = vmatpush.msra.mxu0 0.0
    %310 = vmatpush.msra.mxu0 %v154
    %311 = vmatpush.msra.mxu0 %v146
    %312 = vmatpush.msra.mxu0 %v138
    %313 = vmatpush.msra.mxu0 %v130
    %314 = vmatmul.f32.gmra.mxu0 %v176
    %v315 = vpop.f32.mrf.mxu0
    %v316 = vadd.f32 %v164, %v315
    %317 = vdwg.mxu0
    %318 = vmatpush.msra.mxu0 0.0
    %319 = vmatpush.msra.mxu0 0.0
    %320 = vmatpush.msra.mxu0 0.0
    %321 = vmatpush.msra.mxu0 0.0
    %322 = vmatpush.msra.mxu0 0.0
    %323 = vmatpush.msra.mxu0 0.0
    %324 = vmatpush.msra.mxu0 0.0
    %325 = vmatpush.msra.mxu0 0.0
    %326 = vmatpush.msra.mxu0 0.0
    %327 = vmatpush.msra.mxu0 0.0
    %328 = vmatpush.msra.mxu0 0.0
    %329 = vmatpush.msra.mxu0 0.0
    %330 = vmatpush.msra.mxu0 %v155
    %331 = vmatpush.msra.mxu0 %v147
    %332 = vmatpush.msra.mxu0 %v139
    %333 = vmatpush.msra.mxu0 %v131
    %334 = vmatmul.f32.gmra.mxu0 %v176
    %v335 = vpop.f32.mrf.mxu0
    %v336 = vadd.f32 %v165, %v335
    %337 = vdwg.mxu0
    %v346 = vrot.slane %v216, 7
    %v347 = vrot.slane %v236, 6
    %v348 = vrot.slane %v256, 5
    %v349 = vrot.slane %v276, 4
    %v350 = vrot.slane %v296, 3
    %v351 = vrot.slane %v316, 2
    %v352 = vrot.slane %v336, 1
    %vm353 = vcmask 1040384
    %v354 = vsel %vm353, %v196, %v346
    %vm355 = vcmask 1042434
    %v356 = vsel %vm355, %v347, %v348
    %vm357 = vcmask 1041408
    %v358 = vsel %vm357, %v354, %v356
    %vm359 = vcmask 1044484
    %v360 = vsel %vm359, %v349, %v350
    %vm361 = vcmask 1046534
    %v362 = vsel %vm361, %v351, %v352
    %vm363 = vcmask 1045508
    %v364 = vsel %vm363, %v360, %v362
    %vm365 = vcmask 1043456
    %v366 = vsel %vm365, %v358, %v364
    %vm367 = vcmask 1041409
    %v368 = vsel %vm367, %v196, %v346
    %vm369 = vcmask 1043459
    %v370 = vsel %vm369, %v347, %v348
    %vm371 = vcmask 1042433
    %v372 = vsel %vm371, %v368, %v370
    %vm373 = vcmask 1045509
    %v374 = vsel %vm373, %v349, %v350
    %vm375 = vcmask 1046528
    %v376 = vsel %vm375, %v352, %v351
    %vm377 = vcmask 1046533
    %v378 = vsel %vm377, %v374, %v376
    %vm379 = vcmask 1044481
    %v380 = vsel %vm379, %v372, %v378
    %v381 = vrot.slane %v380, 1
    %v384 = vld [vmem:[#allocation8] sm:$0xff]
    %v385 = vld [vmem:[#allocation8 + $0x8] sm:$0xff]
    %v386 = vld [vmem:[#allocation8 + $0x10] sm:$0xff]
    %v387 = vld [vmem:[#allocation8 + $0x18] sm:$0xff]
    %v388 = vld [vmem:[#allocation8 + $0x20] sm:$0xff]
    %v389 = vld [vmem:[#allocation8 + $0x28] sm:$0xff]
    %v390 = vld [vmem:[#allocation8 + $0x30] sm:$0xff]
    %v391 = vld [vmem:[#allocation8 + $0x38] sm:$0xff]
    %v392 = vld [vmem:[#allocation8 + $0x40] sm:$0xff]
    %v393 = vld [vmem:[#allocation8 + $0x48] sm:$0xff]
    %v394 = vld [vmem:[#allocation8 + $0x50] sm:$0xff]
    %v395 = vld [vmem:[#allocation8 + $0x58] sm:$0xff]
    %v396 = vld [vmem:[#allocation8 + $0x60] sm:$0xff]
    %v397 = vld [vmem:[#allocation8 + $0x68] sm:$0xff]
    %v398 = vld [vmem:[#allocation8 + $0x70] sm:$0xff]
    %v399 = vld [vmem:[#allocation8 + $0x78] sm:$0xff]
    %v400 = vld [vmem:[#allocation8 + $0x80] sm:$0xff]
    %v401 = vld [vmem:[#allocation8 + $0x88] sm:$0xff]
    %v402 = vld [vmem:[#allocation8 + $0x90] sm:$0xff]
    %v403 = vld [vmem:[#allocation8 + $0x98] sm:$0xff]
    %v404 = vld [vmem:[#allocation8 + $0xa0] sm:$0xff]
    %v405 = vld [vmem:[#allocation8 + $0xa8] sm:$0xff]
    %v406 = vld [vmem:[#allocation8 + $0xb0] sm:$0xff]
    %v407 = vld [vmem:[#allocation8 + $0xb8] sm:$0xff]
    %v408 = vld [vmem:[#allocation8 + $0xc0] sm:$0xff]
    %v409 = vld [vmem:[#allocation8 + $0xc8] sm:$0xff]
    %v410 = vld [vmem:[#allocation8 + $0xd0] sm:$0xff]
    %v411 = vld [vmem:[#allocation8 + $0xd8] sm:$0xff]
    %v412 = vld [vmem:[#allocation8 + $0xe0] sm:$0xff]
    %v413 = vld [vmem:[#allocation8 + $0xe8] sm:$0xff]
    %v414 = vld [vmem:[#allocation8 + $0xf0] sm:$0xff]
    %v415 = vld [vmem:[#allocation8 + $0xf8] sm:$0xff]
    %v416 = vld [vmem:[#allocation8 + $0x100] sm:$0xff]
    %v417 = vld [vmem:[#allocation8 + $0x108] sm:$0xff]
    %v418 = vld [vmem:[#allocation8 + $0x110] sm:$0xff]
    %v419 = vld [vmem:[#allocation8 + $0x118] sm:$0xff]
    %v420 = vld [vmem:[#allocation8 + $0x120] sm:$0xff]
    %v421 = vld [vmem:[#allocation8 + $0x128] sm:$0xff]
    %v422 = vld [vmem:[#allocation8 + $0x130] sm:$0xff]
    %v423 = vld [vmem:[#allocation8 + $0x138] sm:$0xff]
    %v424 = vld [vmem:[#allocation8 + $0x140] sm:$0xff]
    %v425 = vld [vmem:[#allocation8 + $0x148] sm:$0xff]
    %v426 = vld [vmem:[#allocation8 + $0x150] sm:$0xff]
    %v427 = vld [vmem:[#allocation8 + $0x158] sm:$0xff]
    %v428 = vld [vmem:[#allocation8 + $0x160] sm:$0xff]
    %v429 = vld [vmem:[#allocation8 + $0x168] sm:$0xff]
    %v430 = vld [vmem:[#allocation8 + $0x170] sm:$0xff]
    %v431 = vld [vmem:[#allocation8 + $0x178] sm:$0xff]
    %v432 = vld [vmem:[#allocation8 + $0x180] sm:$0xff]
    %v433 = vld [vmem:[#allocation8 + $0x188] sm:$0xff]
    %v434 = vld [vmem:[#allocation8 + $0x190] sm:$0xff]
    %v435 = vld [vmem:[#allocation8 + $0x198] sm:$0xff]
    %v436 = vld [vmem:[#allocation8 + $0x1a0] sm:$0xff]
    %v437 = vld [vmem:[#allocation8 + $0x1a8] sm:$0xff]
    %v438 = vld [vmem:[#allocation8 + $0x1b0] sm:$0xff]
    %v439 = vld [vmem:[#allocation8 + $0x1b8] sm:$0xff]
    %v440 = vld [vmem:[#allocation8 + $0x1c0] sm:$0xff]
    %v441 = vld [vmem:[#allocation8 + $0x1c8] sm:$0xff]
    %v442 = vld [vmem:[#allocation8 + $0x1d0] sm:$0xff]
    %v443 = vld [vmem:[#allocation8 + $0x1d8] sm:$0xff]
    %v444 = vld [vmem:[#allocation8 + $0x1e0] sm:$0xff]
    %v445 = vld [vmem:[#allocation8 + $0x1e8] sm:$0xff]
    %v446 = vld [vmem:[#allocation8 + $0x1f0] sm:$0xff]
    %v447 = vld [vmem:[#allocation8 + $0x1f8] sm:$0xff]
    %v448 = vld [vmem:[#allocation8 + $0x200] sm:$0xff]
    %v449 = vld [vmem:[#allocation8 + $0x208] sm:$0xff]
    %v450 = vld [vmem:[#allocation8 + $0x210] sm:$0xff]
    %v451 = vld [vmem:[#allocation8 + $0x218] sm:$0xff]
    %v452 = vld [vmem:[#allocation8 + $0x220] sm:$0xff]
    %v453 = vld [vmem:[#allocation8 + $0x228] sm:$0xff]
    %v454 = vld [vmem:[#allocation8 + $0x230] sm:$0xff]
    %v455 = vld [vmem:[#allocation8 + $0x238] sm:$0xff]
    %v456 = vld [vmem:[#allocation8 + $0x240] sm:$0xff]
    %v457 = vld [vmem:[#allocation8 + $0x248] sm:$0xff]
    %v458 = vld [vmem:[#allocation8 + $0x250] sm:$0xff]
    %v459 = vld [vmem:[#allocation8 + $0x258] sm:$0xff]
    %v460 = vld [vmem:[#allocation8 + $0x260] sm:$0xff]
    %v461 = vld [vmem:[#allocation8 + $0x268] sm:$0xff]
    %v462 = vld [vmem:[#allocation8 + $0x270] sm:$0xff]
    %v463 = vld [vmem:[#allocation8 + $0x278] sm:$0xff]
    %v464 = vld [vmem:[#allocation8 + $0x280] sm:$0xff]
    %v465 = vld [vmem:[#allocation8 + $0x288] sm:$0xff]
    %v466 = vld [vmem:[#allocation8 + $0x290] sm:$0xff]
    %v467 = vld [vmem:[#allocation8 + $0x298] sm:$0xff]
    %v468 = vld [vmem:[#allocation8 + $0x2a0] sm:$0xff]
    %v469 = vld [vmem:[#allocation8 + $0x2a8] sm:$0xff]
    %v470 = vld [vmem:[#allocation8 + $0x2b0] sm:$0xff]
    %v471 = vld [vmem:[#allocation8 + $0x2b8] sm:$0xff]
    %v472 = vld [vmem:[#allocation8 + $0x2c0] sm:$0xff]
    %v473 = vld [vmem:[#allocation8 + $0x2c8] sm:$0xff]
    %v474 = vld [vmem:[#allocation8 + $0x2d0] sm:$0xff]
    %v475 = vld [vmem:[#allocation8 + $0x2d8] sm:$0xff]
    %v476 = vld [vmem:[#allocation8 + $0x2e0] sm:$0xff]
    %v477 = vld [vmem:[#allocation8 + $0x2e8] sm:$0xff]
    %v478 = vld [vmem:[#allocation8 + $0x2f0] sm:$0xff]
    %v479 = vld [vmem:[#allocation8 + $0x2f8] sm:$0xff]
    %v480 = vld [vmem:[%s4] sm:$0x3]
    %v481 = vrot.slane %v366, 7
    %v482 = vrot.slane %v381, 7
    %v483 = vsel %vm353, %v481, %v482
    %v486 = vsel %vm353, 0.0, %v481
    %v487 = vlaneseq
    %v488 = vshrl.u32 %v487, 7
    %v489 = vadd.s32 %v488, 8
    %vm490 = vcmp.lt.s32.totalorder %v488, 0
    %v491 = vsub.s32 0, %v488
    %v492 = vsel %vm490, %v491, %v488
    %v493 = vshrl.u32 %v492, 3
    %v494 = vand.u32 %v492, 7
    %v495 = vsub.s32 0, %v494
    %v496 = vsel %vm490, %v495, %v494
    %vm497 = vcmp.lt.s32.totalorder %v489, 0
    %v498 = vsub.s32 0, %v489
    %v499 = vsel %vm497, %v498, %v489
    %v500 = vshrl.u32 %v499, 3
    %v501 = vand.u32 %v499, 7
    %v502 = vsub.s32 0, %v501
    %v503 = vsel %vm497, %v502, %v501
    %vm504 = vcmp.ne.s32.totalorder %v496, 0
    %vm505 = vcmp.ne.s32.totalorder %v503, 0
    %vm506 = vcmp.lt.s32.totalorder %v496, 0
    %vm507 = vcmp.lt.s32.totalorder %v503, 0
    %vm508 = vmand %vm506, %vm504
    %vm509 = vmand %vm507, %vm505
    %v510 = vadd.s32 %v496, 8
    %v511 = vadd.s32 %v503, 8
    %v512 = vsel %vm508, %v510, %v496
    %v513 = vsel %vm509, %v511, %v503
    %vm514 = vcmp.eq.s32.totalorder %v512, 0
    %vm515 = vcmp.eq.s32.totalorder %v513, 0
    %v516 = vsel %vm514, 1, 0
    %v517 = vsel %vm515, 1, 0
    %vm518 = vcmp.eq.s32.totalorder %v516, 1
    %vm519 = vcmp.eq.s32.totalorder %v517, 1
    %v520 = vsel %vm518, 0.0, %v486
    %v521 = vsel %vm519, 0.0, %v483
    %v522 = vrot.slane %v366, 1
    %v523 = vrot.slane %v381, 1
    %v524 = vsel %vm375, %v522, %v523
    %v527 = vsel %vm375, %v523, 0.0
    %vm528 = vcmp.eq.s32.totalorder %v512, 7
    %vm529 = vcmp.eq.s32.totalorder %v513, 7
    %v530 = vsel %vm528, 1, 0
    %v531 = vsel %vm529, 1, 0
    %vm532 = vcmp.eq.s32.totalorder %v530, 1
    %vm533 = vcmp.eq.s32.totalorder %v531, 1
    %v534 = vsel %vm532, 0.0, %v524
    %v535 = vsel %vm533, 0.0, %v527
    %v537 = vperm.slane %v480, 0
    %v538 = vperm.slane %v480, 1
    %541 = vmatpush.msra.mxu0 %v414
    %542 = vmatpush.msra.mxu0 %v412
    %543 = vmatpush.msra.mxu0 %v410
    %544 = vmatpush.msra.mxu0 %v408
    %545 = vmatpush.msra.mxu0 %v406
    %546 = vmatpush.msra.mxu0 %v404
    %547 = vmatpush.msra.mxu0 %v402
    %548 = vmatpush.msra.mxu0 %v400
    %549 = vmatpush.msra.mxu0 %v398
    %550 = vmatpush.msra.mxu0 %v396
    %551 = vmatpush.msra.mxu0 %v394
    %552 = vmatpush.msra.mxu0 %v392
    %553 = vmatpush.msra.mxu0 %v390
    %554 = vmatpush.msra.mxu0 %v388
    %555 = vmatpush.msra.mxu0 %v386
    %556 = vmatpush.msra.mxu0 %v384
    %557 = vmatmul.f32.gmra.mxu0 %v520
    %v558 = vpop.f32.mrf.mxu0
    %v559 = vadd.f32 %v537, %v558
    %560 = vmatmul.f32.gmra.mxu0 %v521
    %v561 = vpop.f32.mrf.mxu0
    %v562 = vadd.f32 %v537, %v561
    %563 = vdwg.mxu0
    %564 = vmatpush.msra.mxu0 %v446
    %565 = vmatpush.msra.mxu0 %v444
    %566 = vmatpush.msra.mxu0 %v442
    %567 = vmatpush.msra.mxu0 %v440
    %568 = vmatpush.msra.mxu0 %v438
    %569 = vmatpush.msra.mxu0 %v436
    %570 = vmatpush.msra.mxu0 %v434
    %571 = vmatpush.msra.mxu0 %v432
    %572 = vmatpush.msra.mxu0 %v430
    %573 = vmatpush.msra.mxu0 %v428
    %574 = vmatpush.msra.mxu0 %v426
    %575 = vmatpush.msra.mxu0 %v424
    %576 = vmatpush.msra.mxu0 %v422
    %577 = vmatpush.msra.mxu0 %v420
    %578 = vmatpush.msra.mxu0 %v418
    %579 = vmatpush.msra.mxu0 %v416
    %580 = vmatmul.f32.gmra.mxu0 %v366
    %v581 = vpop.f32.mrf.mxu0
    %v582 = vadd.f32 %v559, %v581
    %583 = vmatmul.f32.gmra.mxu0 %v381
    %v584 = vpop.f32.mrf.mxu0
    %v585 = vadd.f32 %v562, %v584
    %586 = vdwg.mxu0
    %587 = vmatpush.msra.mxu0 %v478
    %588 = vmatpush.msra.mxu0 %v476
    %589 = vmatpush.msra.mxu0 %v474
    %590 = vmatpush.msra.mxu0 %v472
    %591 = vmatpush.msra.mxu0 %v470
    %592 = vmatpush.msra.mxu0 %v468
    %593 = vmatpush.msra.mxu0 %v466
    %594 = vmatpush.msra.mxu0 %v464
    %595 = vmatpush.msra.mxu0 %v462
    %596 = vmatpush.msra.mxu0 %v460
    %597 = vmatpush.msra.mxu0 %v458
    %598 = vmatpush.msra.mxu0 %v456
    %599 = vmatpush.msra.mxu0 %v454
    %600 = vmatpush.msra.mxu0 %v452
    %601 = vmatpush.msra.mxu0 %v450
    %602 = vmatpush.msra.mxu0 %v448
    %603 = vmatmul.f32.gmra.mxu0 %v534
    %v604 = vpop.f32.mrf.mxu0
    %v605 = vadd.f32 %v582, %v604
    %606 = vmatmul.f32.gmra.mxu0 %v535
    %v607 = vpop.f32.mrf.mxu0
    %v608 = vadd.f32 %v585, %v607
    %609 = vdwg.mxu0
    %610 = vmatpush.msra.mxu0 %v415
    %611 = vmatpush.msra.mxu0 %v413
    %612 = vmatpush.msra.mxu0 %v411
    %613 = vmatpush.msra.mxu0 %v409
    %614 = vmatpush.msra.mxu0 %v407
    %615 = vmatpush.msra.mxu0 %v405
    %616 = vmatpush.msra.mxu0 %v403
    %617 = vmatpush.msra.mxu0 %v401
    %618 = vmatpush.msra.mxu0 %v399
    %619 = vmatpush.msra.mxu0 %v397
    %620 = vmatpush.msra.mxu0 %v395
    %621 = vmatpush.msra.mxu0 %v393
    %622 = vmatpush.msra.mxu0 %v391
    %623 = vmatpush.msra.mxu0 %v389
    %624 = vmatpush.msra.mxu0 %v387
    %625 = vmatpush.msra.mxu0 %v385
    %626 = vmatmul.f32.gmra.mxu0 %v520
    %v627 = vpop.f32.mrf.mxu0
    %v628 = vadd.f32 %v538, %v627
    %629 = vmatmul.f32.gmra.mxu0 %v521
    %v630 = vpop.f32.mrf.mxu0
    %v631 = vadd.f32 %v538, %v630
    %632 = vdwg.mxu0
    %633 = vmatpush.msra.mxu0 %v447
    %634 = vmatpush.msra.mxu0 %v445
    %635 = vmatpush.msra.mxu0 %v443
    %636 = vmatpush.msra.mxu0 %v441
    %637 = vmatpush.msra.mxu0 %v439
    %638 = vmatpush.msra.mxu0 %v437
    %639 = vmatpush.msra.mxu0 %v435
    %640 = vmatpush.msra.mxu0 %v433
    %641 = vmatpush.msra.mxu0 %v431
    %642 = vmatpush.msra.mxu0 %v429
    %643 = vmatpush.msra.mxu0 %v427
    %644 = vmatpush.msra.mxu0 %v425
    %645 = vmatpush.msra.mxu0 %v423
    %646 = vmatpush.msra.mxu0 %v421
    %647 = vmatpush.msra.mxu0 %v419
    %648 = vmatpush.msra.mxu0 %v417
    %649 = vmatmul.f32.gmra.mxu0 %v366
    %v650 = vpop.f32.mrf.mxu0
    %v651 = vadd.f32 %v628, %v650
    %652 = vmatmul.f32.gmra.mxu0 %v381
    %v653 = vpop.f32.mrf.mxu0
    %v654 = vadd.f32 %v631, %v653
    %655 = vdwg.mxu0
    %656 = vmatpush.msra.mxu0 %v479
    %657 = vmatpush.msra.mxu0 %v477
    %658 = vmatpush.msra.mxu0 %v475
    %659 = vmatpush.msra.mxu0 %v473
    %660 = vmatpush.msra.mxu0 %v471
    %661 = vmatpush.msra.mxu0 %v469
    %662 = vmatpush.msra.mxu0 %v467
    %663 = vmatpush.msra.mxu0 %v465
    %664 = vmatpush.msra.mxu0 %v463
    %665 = vmatpush.msra.mxu0 %v461
    %666 = vmatpush.msra.mxu0 %v459
    %667 = vmatpush.msra.mxu0 %v457
    %668 = vmatpush.msra.mxu0 %v455
    %669 = vmatpush.msra.mxu0 %v453
    %670 = vmatpush.msra.mxu0 %v451
    %671 = vmatpush.msra.mxu0 %v449
    %672 = vmatmul.f32.gmra.mxu0 %v534
    %v673 = vpop.f32.mrf.mxu0
    %v674 = vadd.f32 %v651, %v673
    %675 = vmatmul.f32.gmra.mxu0 %v535
    %v676 = vpop.f32.mrf.mxu0
    %v677 = vadd.f32 %v654, %v676
    %678 = vdwg.mxu0
    %v683 = vrot.slane %v674, 4
    %v684 = vrot.slane %v677, 4
    %v685 = vsel %vm365, %v605, %v683
    %v686 = vsel %vm365, %v683, %v605
    %v687 = vrot.slane %v686, 4
    %v688 = vsel %vm365, %v608, %v684
    %v689 = vsel %vm365, %v684, %v608
    %v690 = vrot.slane %v689, 4
    %v696 = vunpack.c.l.s4 1935823168
    %v697 = vunpack.c.0.s8 %v696
    %v698 = vperm.slane %v685, %v697
    %v700 = vunpack.c.l.s4 1935823168
    %v701 = vunpack.c.0.s8 %v700
    %v702 = vperm.slane %v687, %v701
    %v704 = vunpack.c.l.s4 1935823168
    %v705 = vunpack.c.0.s8 %v704
    %v706 = vperm.slane %v688, %v705
    %v708 = vunpack.c.l.s4 1935823168
    %v709 = vunpack.c.0.s8 %v708
    %v710 = vperm.slane %v690, %v709
    %v711 = vadd.f32 %v698, %v702
    %v712 = vadd.f32 %v711, %v706
    %v713 = vadd.f32 %v712, %v710
    %v714 = vrot.slane %v713, 4
    %v715 = vadd.f32 %v713, %v714
    %v716 = vrot.slane %v715, 2
    %v717 = vadd.f32 %v715, %v716
    %v718 = vrot.slane %v717, 1
    %v719 = vadd.f32 %v717, %v718
    %v720 = vmul.f32 %v698, %v698
    %v721 = vmul.f32 %v702, %v702
    %v722 = vmul.f32 %v706, %v706
    %v723 = vmul.f32 %v710, %v710
    %v724 = vadd.f32 %v720, %v721
    %v725 = vadd.f32 %v724, %v722
    %v726 = vadd.f32 %v725, %v723
    %v727 = vrot.slane %v726, 4
    %v728 = vadd.f32 %v726, %v727
    %v729 = vrot.slane %v728, 2
    %v730 = vadd.f32 %v728, %v729
    %v731 = vrot.slane %v730, 1
    %v732 = vadd.f32 %v730, %v731
    %v733 = vmul.f32 %v719, 0.03125
    %v734 = vmul.f32 %v732, 0.03125
    %v735 = vmul.f32 %v733, %v733
    %v736 = vsub.f32 %v734, %v735
    %v737 = vadd.f32 %v736, 1e-05
    %v738 = vrsqrt.pop %v737
    %v739 = vmul.f32 %v738, %v737
    %v740 = vmul.f32 %v739, %v738
    %v741 = vmul.f32 0.5, %v740
    %v742 = vsub.f32 1.5, %v741
    %v743 = vmul.f32 %v738, %v742
    %vm744 = vweird.f32 %v737
    %vm745 = vweird.f32 %v738
    %vm746 = vmor %vm744, %vm745
    %v747 = vsel %vm746, %v738, %v743
    %v748 = vmul.f32 %v698, %v747
    %v749 = vmul.f32 %v702, %v747
    %v750 = vmul.f32 %v706, %v747
    %v751 = vmul.f32 %v710, %v747
    %v752 = vmul.f32 %v733, %v747
    %v753 = vsub.f32 %v748, %v752
    %v754 = vsub.f32 %v749, %v752
    %v755 = vsub.f32 %v750, %v752
    %v756 = vsub.f32 %v751, %v752
    %v757 = vmax.f32 %v753, 0.0
    %v758 = vmax.f32 %v754, 0.0
    %v759 = vmax.f32 %v755, 0.0
    %v760 = vmax.f32 %v756, 0.0
    %v761 = vld [vmem:[#allocation10] sm:$0xff]
    %v762 = vld [vmem:[#allocation10 + $0x8] sm:$0xff]
    %v763 = vld [vmem:[#allocation10 + $0x10] sm:$0xff]
    %v764 = vld [vmem:[#allocation10 + $0x18] sm:$0xff]
    %v765 = vld [vmem:[#allocation10 + $0x20] sm:$0xff]
    %v766 = vld [vmem:[#allocation10 + $0x28] sm:$0xff]
    %v767 = vld [vmem:[#allocation10 + $0x30] sm:$0xff]
    %v768 = vld [vmem:[#allocation10 + $0x38] sm:$0xff]
    %v769 = vld [vmem:[#allocation10 + $0x40] sm:$0xff]
    %v770 = vld [vmem:[#allocation10 + $0x48] sm:$0xff]
    %v771 = vld [vmem:[#allocation10 + $0x50] sm:$0xff]
    %v772 = vld [vmem:[#allocation10 + $0x58] sm:$0xff]
    %v773 = vld [vmem:[#allocation10 + $0x60] sm:$0xff]
    %v774 = vld [vmem:[#allocation10 + $0x68] sm:$0xff]
    %v775 = vld [vmem:[#allocation10 + $0x70] sm:$0xff]
    %v776 = vld [vmem:[#allocation10 + $0x78] sm:$0xff]
    %v777 = vld [vmem:[#allocation10 + $0x80] sm:$0xff]
    %v778 = vld [vmem:[#allocation10 + $0x88] sm:$0xff]
    %v779 = vld [vmem:[#allocation10 + $0x90] sm:$0xff]
    %v780 = vld [vmem:[#allocation10 + $0x98] sm:$0xff]
    %v781 = vld [vmem:[#allocation10 + $0xa0] sm:$0xff]
    %v782 = vld [vmem:[#allocation10 + $0xa8] sm:$0xff]
    %v783 = vld [vmem:[#allocation10 + $0xb0] sm:$0xff]
    %v784 = vld [vmem:[#allocation10 + $0xb8] sm:$0xff]
    %v785 = vld [vmem:[#allocation10 + $0xc0] sm:$0xff]
    %v786 = vld [vmem:[#allocation10 + $0xc8] sm:$0xff]
    %v787 = vld [vmem:[#allocation10 + $0xd0] sm:$0xff]
    %v788 = vld [vmem:[#allocation10 + $0xd8] sm:$0xff]
    %v789 = vld [vmem:[#allocation10 + $0xe0] sm:$0xff]
    %v790 = vld [vmem:[#allocation10 + $0xe8] sm:$0xff]
    %v791 = vld [vmem:[#allocation10 + $0xf0] sm:$0xff]
    %v792 = vld [vmem:[#allocation10 + $0xf8] sm:$0xff]
    %v793 = vld [vmem:[#allocation10 + $0x100] sm:$0xff]
    %v794 = vld [vmem:[#allocation10 + $0x108] sm:$0xff]
    %v795 = vld [vmem:[#allocation10 + $0x110] sm:$0xff]
    %v796 = vld [vmem:[#allocation10 + $0x118] sm:$0xff]
    %v797 = vld [vmem:[#allocation10 + $0x120] sm:$0xff]
    %v798 = vld [vmem:[#allocation10 + $0x128] sm:$0xff]
    %v799 = vld [vmem:[#allocation10 + $0x130] sm:$0xff]
    %v800 = vld [vmem:[#allocation10 + $0x138] sm:$0xff]
    %v801 = vld [vmem:[#allocation10 + $0x140] sm:$0xff]
    %v802 = vld [vmem:[#allocation10 + $0x148] sm:$0xff]
    %v803 = vld [vmem:[#allocation10 + $0x150] sm:$0xff]
    %v804 = vld [vmem:[#allocation10 + $0x158] sm:$0xff]
    %v805 = vld [vmem:[#allocation10 + $0x160] sm:$0xff]
    %v806 = vld [vmem:[#allocation10 + $0x168] sm:$0xff]
    %v807 = vld [vmem:[#allocation10 + $0x170] sm:$0xff]
    %v808 = vld [vmem:[#allocation10 + $0x178] sm:$0xff]
    %v809 = vld [vmem:[#allocation10 + $0x180] sm:$0xff]
    %v810 = vld [vmem:[#allocation10 + $0x188] sm:$0xff]
    %v811 = vld [vmem:[#allocation10 + $0x190] sm:$0xff]
    %v812 = vld [vmem:[#allocation10 + $0x198] sm:$0xff]
    %v813 = vld [vmem:[#allocation10 + $0x1a0] sm:$0xff]
    %v814 = vld [vmem:[#allocation10 + $0x1a8] sm:$0xff]
    %v815 = vld [vmem:[#allocation10 + $0x1b0] sm:$0xff]
    %v816 = vld [vmem:[#allocation10 + $0x1b8] sm:$0xff]
    %v817 = vld [vmem:[#allocation10 + $0x1c0] sm:$0xff]
    %v818 = vld [vmem:[#allocation10 + $0x1c8] sm:$0xff]
    %v819 = vld [vmem:[#allocation10 + $0x1d0] sm:$0xff]
    %v820 = vld [vmem:[#allocation10 + $0x1d8] sm:$0xff]
    %v821 = vld [vmem:[#allocation10 + $0x1e0] sm:$0xff]
    %v822 = vld [vmem:[#allocation10 + $0x1e8] sm:$0xff]
    %v823 = vld [vmem:[#allocation10 + $0x1f0] sm:$0xff]
    %v824 = vld [vmem:[#allocation10 + $0x1f8] sm:$0xff]
    %v825 = vld [vmem:[#allocation10 + $0x200] sm:$0xff]
    %v826 = vld [vmem:[#allocation10 + $0x208] sm:$0xff]
    %v827 = vld [vmem:[#allocation10 + $0x210] sm:$0xff]
    %v828 = vld [vmem:[#allocation10 + $0x218] sm:$0xff]
    %v829 = vld [vmem:[#allocation10 + $0x220] sm:$0xff]
    %v830 = vld [vmem:[#allocation10 + $0x228] sm:$0xff]
    %v831 = vld [vmem:[#allocation10 + $0x230] sm:$0xff]
    %v832 = vld [vmem:[#allocation10 + $0x238] sm:$0xff]
    %v833 = vld [vmem:[#allocation10 + $0x240] sm:$0xff]
    %v834 = vld [vmem:[#allocation10 + $0x248] sm:$0xff]
    %v835 = vld [vmem:[#allocation10 + $0x250] sm:$0xff]
    %v836 = vld [vmem:[#allocation10 + $0x258] sm:$0xff]
    %v837 = vld [vmem:[#allocation10 + $0x260] sm:$0xff]
    %v838 = vld [vmem:[#allocation10 + $0x268] sm:$0xff]
    %v839 = vld [vmem:[#allocation10 + $0x270] sm:$0xff]
    %v840 = vld [vmem:[#allocation10 + $0x278] sm:$0xff]
    %v841 = vld [vmem:[#allocation10 + $0x280] sm:$0xff]
    %v842 = vld [vmem:[#allocation10 + $0x288] sm:$0xff]
    %v843 = vld [vmem:[#allocation10 + $0x290] sm:$0xff]
    %v844 = vld [vmem:[#allocation10 + $0x298] sm:$0xff]
    %v845 = vld [vmem:[#allocation10 + $0x2a0] sm:$0xff]
    %v846 = vld [vmem:[#allocation10 + $0x2a8] sm:$0xff]
    %v847 = vld [vmem:[#allocation10 + $0x2b0] sm:$0xff]
    %v848 = vld [vmem:[#allocation10 + $0x2b8] sm:$0xff]
    %v849 = vld [vmem:[#allocation10 + $0x2c0] sm:$0xff]
    %v850 = vld [vmem:[#allocation10 + $0x2c8] sm:$0xff]
    %v851 = vld [vmem:[#allocation10 + $0x2d0] sm:$0xff]
    %v852 = vld [vmem:[#allocation10 + $0x2d8] sm:$0xff]
    %v853 = vld [vmem:[#allocation10 + $0x2e0] sm:$0xff]
    %v854 = vld [vmem:[#allocation10 + $0x2e8] sm:$0xff]
    %v855 = vld [vmem:[#allocation10 + $0x2f0] sm:$0xff]
    %v856 = vld [vmem:[#allocation10 + $0x2f8] sm:$0xff]
    %v857 = vld [vmem:[%s6] sm:$0x3]
    %v862 = vrot.slane %v757, 7
    %v863 = vrot.slane %v758, 7
    %v864 = vsel %vm353, %v862, %v863
    %v865 = vrot.slane %v759, 7
    %v866 = vsel %vm353, %v863, %v865
    %v867 = vrot.slane %v760, 7
    %v868 = vsel %vm353, %v865, %v867
    %v873 = vsel %vm353, 0.0, %v862
    %v874 = vadd.s32 %v488, 16
    %v875 = vadd.s32 %v488, 24
    %vm876 = vcmp.lt.s32.totalorder %v488, 0
    %v877 = vsub.s32 0, %v488
    %v878 = vsel %vm876, %v877, %v488
    %v879 = vshrl.u32 %v878, 4
    %v880 = vand.u32 %v878, 15
    %v881 = vsub.s32 0, %v880
    %v882 = vsel %vm876, %v881, %v880
    %vm883 = vcmp.lt.s32.totalorder %v489, 0
    %v884 = vsub.s32 0, %v489
    %v885 = vsel %vm883, %v884, %v489
    %v886 = vshrl.u32 %v885, 4
    %v887 = vand.u32 %v885, 15
    %v888 = vsub.s32 0, %v887
    %v889 = vsel %vm883, %v888, %v887
    %vm890 = vcmp.lt.s32.totalorder %v874, 0
    %v891 = vsub.s32 0, %v874
    %v892 = vsel %vm890, %v891, %v874
    %v893 = vshrl.u32 %v892, 4
    %v894 = vand.u32 %v892, 15
    %v895 = vsub.s32 0, %v894
    %v896 = vsel %vm890, %v895, %v894
    %vm897 = vcmp.lt.s32.totalorder %v875, 0
    %v898 = vsub.s32 0, %v875
    %v899 = vsel %vm897, %v898, %v875
    %v900 = vshrl.u32 %v899, 4
    %v901 = vand.u32 %v899, 15
    %v902 = vsub.s32 0, %v901
    %v903 = vsel %vm897, %v902, %v901
    %vm904 = vcmp.ne.s32.totalorder %v882, 0
    %vm905 = vcmp.ne.s32.totalorder %v889, 0
    %vm906 = vcmp.ne.s32.totalorder %v896, 0
    %vm907 = vcmp.ne.s32.totalorder %v903, 0
    %vm908 = vcmp.lt.s32.totalorder %v882, 0
    %vm909 = vcmp.lt.s32.totalorder %v889, 0
    %vm910 = vcmp.lt.s32.totalorder %v896, 0
    %vm911 = vcmp.lt.s32.totalorder %v903, 0
    %vm912 = vmand %vm908, %vm904
    %vm913 = vmand %vm909, %vm905
    %vm914 = vmand %vm910, %vm906
    %vm915 = vmand %vm911, %vm907
    %v916 = vadd.s32 %v882, 16
    %v917 = vadd.s32 %v889, 16
    %v918 = vadd.s32 %v896, 16
    %v919 = vadd.s32 %v903, 16
    %v920 = vsel %vm912, %v916, %v882
    %v921 = vsel %vm913, %v917, %v889
    %v922 = vsel %vm914, %v918, %v896
    %v923 = vsel %vm915, %v919, %v903
    %vm924 = vcmp.eq.s32.totalorder %v920, 0
    %vm925 = vcmp.eq.s32.totalorder %v921, 0
    %vm926 = vcmp.eq.s32.totalorder %v922, 0
    %vm927 = vcmp.eq.s32.totalorder %v923, 0
    %v928 = vsel %vm924, 1, 0
    %v929 = vsel %vm925, 1, 0
    %v930 = vsel %vm926, 1, 0
    %v931 = vsel %vm927, 1, 0
    %vm932 = vcmp.eq.s32.totalorder %v928, 1
    %vm933 = vcmp.eq.s32.totalorder %v929, 1
    %vm934 = vcmp.eq.s32.totalorder %v930, 1
    %vm935 = vcmp.eq.s32.totalorder %v931, 1
    %v936 = vsel %vm932, 0.0, %v873
    %v937 = vsel %vm933, 0.0, %v864
    %v938 = vsel %vm934, 0.0, %v866
    %v939 = vsel %vm935, 0.0, %v868
    %v940 = vrot.slane %v757, 1
    %v941 = vrot.slane %v758, 1
    %v942 = vsel %vm375, %v940, %v941
    %v943 = vrot.slane %v759, 1
    %v944 = vsel %vm375, %v941, %v943
    %v945 = vrot.slane %v760, 1
    %v946 = vsel %vm375, %v943, %v945
    %v951 = vsel %vm375, %v945, 0.0
    %vm952 = vcmp.eq.s32.totalorder %v920, 15
    %vm953 = vcmp.eq.s32.totalorder %v921, 15
    %vm954 = vcmp.eq.s32.totalorder %v922, 15
    %vm955 = vcmp.eq.s32.totalorder %v923, 15
    %v956 = vsel %vm952, 1, 0
    %v957 = vsel %vm953, 1, 0
    %v958 = vsel %vm954, 1, 0
    %v959 = vsel %vm955, 1, 0
    %vm960 = vcmp.eq.s32.totalorder %v956, 1
    %vm961 = vcmp.eq.s32.totalorder %v957, 1
    %vm962 = vcmp.eq.s32.totalorder %v958, 1
    %vm963 = vcmp.eq.s32.totalorder %v959, 1
    %v964 = vsel %vm960, 0.0, %v942
    %v965 = vsel %vm961, 0.0, %v944
    %v966 = vsel %vm962, 0.0, %v946
    %v967 = vsel %vm963, 0.0, %v951
    %v969 = vperm.slane %v857, 0
    %v970 = vperm.slane %v857, 1
    %973 = vmatpush.msra.mxu0 %v791
    %974 = vmatpush.msra.mxu0 %v789
    %975 = vmatpush.msra.mxu0 %v787
    %976 = vmatpush.msra.mxu0 %v785
    %977 = vmatpush.msra.mxu0 %v783
    %978 = vmatpush.msra.mxu0 %v781
    %979 = vmatpush.msra.mxu0 %v779
    %980 = vmatpush.msra.mxu0 %v777
    %981 = vmatpush.msra.mxu0 %v775
    %982 = vmatpush.msra.mxu0 %v773
    %983 = vmatpush.msra.mxu0 %v771
    %984 = vmatpush.msra.mxu0 %v769
    %985 = vmatpush.msra.mxu0 %v767
    %986 = vmatpush.msra.mxu0 %v765
    %987 = vmatpush.msra.mxu0 %v763
    %988 = vmatpush.msra.mxu0 %v761
    %989 = vmatmul.f32.gmra.mxu0 %v936
    %v990 = vpop.f32.mrf.mxu0
    %v991 = vadd.f32 %v969, %v990
    %992 = vmatmul.f32.gmra.mxu0 %v937
    %v993 = vpop.f32.mrf.mxu0
    %v994 = vadd.f32 %v969, %v993
    %995 = vmatmul.f32.gmra.mxu0 %v938
    %v996 = vpop.f32.mrf.mxu0
    %v997 = vadd.f32 %v969, %v996
    %998 = vmatmul.f32.gmra.mxu0 %v939
    %v999 = vpop.f32.mrf.mxu0
    %v1000 = vadd.f32 %v969, %v999
    %1001 = vdwg.mxu0
    %1002 = vmatpush.msra.mxu0 %v823
    %1003 = vmatpush.msra.mxu0 %v821
    %1004 = vmatpush.msra.mxu0 %v819
    %1005 = vmatpush.msra.mxu0 %v817
    %1006 = vmatpush.msra.mxu0 %v815
    %1007 = vmatpush.msra.mxu0 %v813
    %1008 = vmatpush.msra.mxu0 %v811
    %1009 = vmatpush.msra.mxu0 %v809
    %1010 = vmatpush.msra.mxu0 %v807
    %1011 = vmatpush.msra.mxu0 %v805
    %1012 = vmatpush.msra.mxu0 %v803
    %1013 = vmatpush.msra.mxu0 %v801
    %1014 = vmatpush.msra.mxu0 %v799
    %1015 = vmatpush.msra.mxu0 %v797
    %1016 = vmatpush.msra.mxu0 %v795
    %1017 = vmatpush.msra.mxu0 %v793
    %1018 = vmatmul.f32.gmra.mxu0 %v757
    %v1019 = vpop.f32.mrf.mxu0
    %v1020 = vadd.f32 %v991, %v1019
    %1021 = vmatmul.f32.gmra.mxu0 %v758
    %v1022 = vpop.f32.mrf.mxu0
    %v1023 = vadd.f32 %v994, %v1022
    %1024 = vmatmul.f32.gmra.mxu0 %v759
    %v1025 = vpop.f32.mrf.mxu0
    %v1026 = vadd.f32 %v997, %v1025
    %1027 = vmatmul.f32.gmra.mxu0 %v760
    %v1028 = vpop.f32.mrf.mxu0
    %v1029 = vadd.f32 %v1000, %v1028
    %1030 = vdwg.mxu0
    %1031 = vmatpush.msra.mxu0 %v855
    %1032 = vmatpush.msra.mxu0 %v853
    %1033 = vmatpush.msra.mxu0 %v851
    %1034 = vmatpush.msra.mxu0 %v849
    %1035 = vmatpush.msra.mxu0 %v847
    %1036 = vmatpush.msra.mxu0 %v845
    %1037 = vmatpush.msra.mxu0 %v843
    %1038 = vmatpush.msra.mxu0 %v841
    %1039 = vmatpush.msra.mxu0 %v839
    %1040 = vmatpush.msra.mxu0 %v837
    %1041 = vmatpush.msra.mxu0 %v835
    %1042 = vmatpush.msra.mxu0 %v833
    %1043 = vmatpush.msra.mxu0 %v831
    %1044 = vmatpush.msra.mxu0 %v829
    %1045 = vmatpush.msra.mxu0 %v827
    %1046 = vmatpush.msra.mxu0 %v825
    %1047 = vmatmul.f32.gmra.mxu0 %v964
    %v1048 = vpop.f32.mrf.mxu0
    %v1049 = vadd.f32 %v1020, %v1048
    %1050 = vmatmul.f32.gmra.mxu0 %v965
    %v1051 = vpop.f32.mrf.mxu0
    %v1052 = vadd.f32 %v1023, %v1051
    %1053 = vmatmul.f32.gmra.mxu0 %v966
    %v1054 = vpop.f32.mrf.mxu0
    %v1055 = vadd.f32 %v1026, %v1054
    %1056 = vmatmul.f32.gmra.mxu0 %v967
    %v1057 = vpop.f32.mrf.mxu0
    %v1058 = vadd.f32 %v1029, %v1057
    %1059 = vdwg.mxu0
    %1060 = vmatpush.msra.mxu0 %v792
    %1061 = vmatpush.msra.mxu0 %v790
    %1062 = vmatpush.msra.mxu0 %v788
    %1063 = vmatpush.msra.mxu0 %v786
    %1064 = vmatpush.msra.mxu0 %v784
    %1065 = vmatpush.msra.mxu0 %v782
    %1066 = vmatpush.msra.mxu0 %v780
    %1067 = vmatpush.msra.mxu0 %v778
    %1068 = vmatpush.msra.mxu0 %v776
    %1069 = vmatpush.msra.mxu0 %v774
    %1070 = vmatpush.msra.mxu0 %v772
    %1071 = vmatpush.msra.mxu0 %v770
    %1072 = vmatpush.msra.mxu0 %v768
    %1073 = vmatpush.msra.mxu0 %v766
    %1074 = vmatpush.msra.mxu0 %v764
    %1075 = vmatpush.msra.mxu0 %v762
    %1076 = vmatmul.f32.gmra.mxu0 %v936
    %v1077 = vpop.f32.mrf.mxu0
    %v1078 = vadd.f32 %v970, %v1077
    %1079 = vmatmul.f32.gmra.mxu0 %v937
    %v1080 = vpop.f32.mrf.mxu0
    %v1081 = vadd.f32 %v970, %v1080
    %1082 = vmatmul.f32.gmra.mxu0 %v938
    %v1083 = vpop.f32.mrf.mxu0
    %v1084 = vadd.f32 %v970, %v1083
    %1085 = vmatmul.f32.gmra.mxu0 %v939
    %v1086 = vpop.f32.mrf.mxu0
    %v1087 = vadd.f32 %v970, %v1086
    %1088 = vdwg.mxu0
    %1089 = vmatpush.msra.mxu0 %v824
    %1090 = vmatpush.msra.mxu0 %v822
    %1091 = vmatpush.msra.mxu0 %v820
    %1092 = vmatpush.msra.mxu0 %v818
    %1093 = vmatpush.msra.mxu0 %v816
    %1094 = vmatpush.msra.mxu0 %v814
    %1095 = vmatpush.msra.mxu0 %v812
    %1096 = vmatpush.msra.mxu0 %v810
    %1097 = vmatpush.msra.mxu0 %v808
    %1098 = vmatpush.msra.mxu0 %v806
    %1099 = vmatpush.msra.mxu0 %v804
    %1100 = vmatpush.msra.mxu0 %v802
    %1101 = vmatpush.msra.mxu0 %v800
    %1102 = vmatpush.msra.mxu0 %v798
    %1103 = vmatpush.msra.mxu0 %v796
    %1104 = vmatpush.msra.mxu0 %v794
    %1105 = vmatmul.f32.gmra.mxu0 %v757
    %v1106 = vpop.f32.mrf.mxu0
    %v1107 = vadd.f32 %v1078, %v1106
    %1108 = vmatmul.f32.gmra.mxu0 %v758
    %v1109 = vpop.f32.mrf.mxu0
    %v1110 = vadd.f32 %v1081, %v1109
    %1111 = vmatmul.f32.gmra.mxu0 %v759
    %v1112 = vpop.f32.mrf.mxu0
    %v1113 = vadd.f32 %v1084, %v1112
    %1114 = vmatmul.f32.gmra.mxu0 %v760
    %v1115 = vpop.f32.mrf.mxu0
    %v1116 = vadd.f32 %v1087, %v1115
    %1117 = vdwg.mxu0
    %1118 = vmatpush.msra.mxu0 %v856
    %1119 = vmatpush.msra.mxu0 %v854
    %1120 = vmatpush.msra.mxu0 %v852
    %1121 = vmatpush.msra.mxu0 %v850
    %1122 = vmatpush.msra.mxu0 %v848
    %1123 = vmatpush.msra.mxu0 %v846
    %1124 = vmatpush.msra.mxu0 %v844
    %1125 = vmatpush.msra.mxu0 %v842
    %1126 = vmatpush.msra.mxu0 %v840
    %1127 = vmatpush.msra.mxu0 %v838
    %1128 = vmatpush.msra.mxu0 %v836
    %1129 = vmatpush.msra.mxu0 %v834
    %1130 = vmatpush.msra.mxu0 %v832
    %1131 = vmatpush.msra.mxu0 %v830
    %1132 = vmatpush.msra.mxu0 %v828
    %1133 = vmatpush.msra.mxu0 %v826
    %1134 = vmatmul.f32.gmra.mxu0 %v964
    %v1135 = vpop.f32.mrf.mxu0
    %v1136 = vadd.f32 %v1107, %v1135
    %1137 = vmatmul.f32.gmra.mxu0 %v965
    %v1138 = vpop.f32.mrf.mxu0
    %v1139 = vadd.f32 %v1110, %v1138
    %1140 = vmatmul.f32.gmra.mxu0 %v966
    %v1141 = vpop.f32.mrf.mxu0
    %v1142 = vadd.f32 %v1113, %v1141
    %1143 = vmatmul.f32.gmra.mxu0 %v967
    %v1144 = vpop.f32.mrf.mxu0
    %v1145 = vadd.f32 %v1116, %v1144
    %1146 = vdwg.mxu0
    %v1155 = vrot.slane %v1136, 4
    %v1156 = vrot.slane %v1139, 4
    %v1157 = vrot.slane %v1142, 4
    %v1158 = vrot.slane %v1145, 4
    %v1159 = vsel %vm365, %v1049, %v1155
    %v1160 = vsel %vm365, %v1155, %v1049
    %v1161 = vrot.slane %v1160, 4
    %v1162 = vsel %vm365, %v1052, %v1156
    %v1163 = vsel %vm365, %v1156, %v1052
    %v1164 = vrot.slane %v1163, 4
    %v1165 = vsel %vm365, %v1055, %v1157
    %v1166 = vsel %vm365, %v1157, %v1055
    %v1167 = vrot.slane %v1166, 4
    %v1168 = vsel %vm365, %v1058, %v1158
    %v1169 = vsel %vm365, %v1158, %v1058
    %v1170 = vrot.slane %v1169, 4
    %v1180 = vunpack.c.l.s4 1935823168
    %v1181 = vunpack.c.0.s8 %v1180
    %v1182 = vperm.slane %v1159, %v1181
    %v1184 = vunpack.c.l.s4 1935823168
    %v1185 = vunpack.c.0.s8 %v1184
    %v1186 = vperm.slane %v1161, %v1185
    %v1188 = vunpack.c.l.s4 1935823168
    %v1189 = vunpack.c.0.s8 %v1188
    %v1190 = vperm.slane %v1162, %v1189
    %v1192 = vunpack.c.l.s4 1935823168
    %v1193 = vunpack.c.0.s8 %v1192
    %v1194 = vperm.slane %v1164, %v1193
    %v1196 = vunpack.c.l.s4 1935823168
    %v1197 = vunpack.c.0.s8 %v1196
    %v1198 = vperm.slane %v1165, %v1197
    %v1200 = vunpack.c.l.s4 1935823168
    %v1201 = vunpack.c.0.s8 %v1200
    %v1202 = vperm.slane %v1167, %v1201
    %v1204 = vunpack.c.l.s4 1935823168
    %v1205 = vunpack.c.0.s8 %v1204
    %v1206 = vperm.slane %v1168, %v1205
    %v1208 = vunpack.c.l.s4 1935823168
    %v1209 = vunpack.c.0.s8 %v1208
    %v1210 = vperm.slane %v1170, %v1209
    %v1211 = vadd.f32 %v1182, %v1186
    %v1212 = vadd.f32 %v1211, %v1190
    %v1213 = vadd.f32 %v1212, %v1194
    %v1214 = vadd.f32 %v1213, %v1198
    %v1215 = vadd.f32 %v1214, %v1202
    %v1216 = vadd.f32 %v1215, %v1206
    %v1217 = vadd.f32 %v1216, %v1210
    %v1218 = vrot.slane %v1217, 4
    %v1219 = vadd.f32 %v1217, %v1218
    %v1220 = vrot.slane %v1219, 2
    %v1221 = vadd.f32 %v1219, %v1220
    %v1222 = vrot.slane %v1221, 1
    %v1223 = vadd.f32 %v1221, %v1222
    %v1224 = vmul.f32 %v1182, %v1182
    %v1225 = vmul.f32 %v1186, %v1186
    %v1226 = vmul.f32 %v1190, %v1190
    %v1227 = vmul.f32 %v1194, %v1194
    %v1228 = vmul.f32 %v1198, %v1198
    %v1229 = vmul.f32 %v1202, %v1202
    %v1230 = vmul.f32 %v1206, %v1206
    %v1231 = vmul.f32 %v1210, %v1210
    %v1232 = vadd.f32 %v1224, %v1225
    %v1233 = vadd.f32 %v1232, %v1226
    %v1234 = vadd.f32 %v1233, %v1227
    %v1235 = vadd.f32 %v1234, %v1228
    %v1236 = vadd.f32 %v1235, %v1229
    %v1237 = vadd.f32 %v1236, %v1230
    %v1238 = vadd.f32 %v1237, %v1231
    %v1239 = vrot.slane %v1238, 4
    %v1240 = vadd.f32 %v1238, %v1239
    %v1241 = vrot.slane %v1240, 2
    %v1242 = vadd.f32 %v1240, %v1241
    %v1243 = vrot.slane %v1242, 1
    %v1244 = vadd.f32 %v1242, %v1243
    %v1245 = vmul.f32 %v1223, 0.015625
    %v1246 = vmul.f32 %v1244, 0.015625
    %v1247 = vmul.f32 %v1245, %v1245
    %v1248 = vsub.f32 %v1246, %v1247
    %v1249 = vadd.f32 %v1248, 1e-05
    %v1250 = vrsqrt.pop %v1249
    %v1251 = vmul.f32 %v1250, %v1249
    %v1252 = vmul.f32 %v1251, %v1250
    %v1253 = vmul.f32 0.5, %v1252
    %v1254 = vsub.f32 1.5, %v1253
    %v1255 = vmul.f32 %v1250, %v1254
    %vm1256 = vweird.f32 %v1249
    %vm1257 = vweird.f32 %v1250
    %vm1258 = vmor %vm1256, %vm1257
    %v1259 = vsel %vm1258, %v1250, %v1255
    %v1260 = vmul.f32 %v1182, %v1259
    %v1261 = vmul.f32 %v1186, %v1259
    %v1262 = vmul.f32 %v1190, %v1259
    %v1263 = vmul.f32 %v1194, %v1259
    %v1264 = vmul.f32 %v1198, %v1259
    %v1265 = vmul.f32 %v1202, %v1259
    %v1266 = vmul.f32 %v1206, %v1259
    %v1267 = vmul.f32 %v1210, %v1259
    %v1268 = vmul.f32 %v1245, %v1259
    %v1269 = vsub.f32 %v1260, %v1268
    %v1270 = vsub.f32 %v1261, %v1268
    %v1271 = vsub.f32 %v1262, %v1268
    %v1272 = vsub.f32 %v1263, %v1268
    %v1273 = vsub.f32 %v1264, %v1268
    %v1274 = vsub.f32 %v1265, %v1268
    %v1275 = vsub.f32 %v1266, %v1268
    %v1276 = vsub.f32 %v1267, %v1268
    %v1277 = vmax.f32 %v1269, 0.0
    %v1278 = vmax.f32 %v1270, 0.0
    %v1279 = vmax.f32 %v1271, 0.0
    %v1280 = vmax.f32 %v1272, 0.0
    %v1281 = vmax.f32 %v1273, 0.0
    %v1282 = vmax.f32 %v1274, 0.0
    %v1283 = vmax.f32 %v1275, 0.0
    %v1284 = vmax.f32 %v1276, 0.0
    %v1293 = vrot.slane %v1277, 7
    %v1294 = vrot.slane %v1278, 7
    %v1295 = vsel %vm353, %v1293, %v1294
    %v1296 = vrot.slane %v1279, 7
    %v1297 = vsel %vm353, %v1294, %v1296
    %v1298 = vrot.slane %v1280, 7
    %v1299 = vsel %vm353, %v1296, %v1298
    %v1300 = vrot.slane %v1281, 7
    %v1301 = vsel %vm353, %v1298, %v1300
    %v1302 = vrot.slane %v1282, 7
    %v1303 = vsel %vm353, %v1300, %v1302
    %v1304 = vrot.slane %v1283, 7
    %v1305 = vsel %vm353, %v1302, %v1304
    %v1306 = vrot.slane %v1284, 7
    %v1307 = vsel %vm353, %v1304, %v1306
    %v1316 = vsel %vm353, 0.0, %v1293
    %v1317 = vadd.s32 %v488, 32
    %v1318 = vadd.s32 %v488, 40
    %v1319 = vadd.s32 %v488, 48
    %v1320 = vadd.s32 %v488, 56
    %vm1321 = vcmp.lt.s32.totalorder %v488, 0
    %v1322 = vsub.s32 0, %v488
    %v1323 = vsel %vm1321, %v1322, %v488
    %v1324 = vshrl.u32 %v1323, 5
    %v1325 = vand.u32 %v1323, 31
    %v1326 = vsub.s32 0, %v1325
    %v1327 = vsel %vm1321, %v1326, %v1325
    %vm1328 = vcmp.lt.s32.totalorder %v489, 0
    %v1329 = vsub.s32 0, %v489
    %v1330 = vsel %vm1328, %v1329, %v489
    %v1331 = vshrl.u32 %v1330, 5
    %v1332 = vand.u32 %v1330, 31
    %v1333 = vsub.s32 0, %v1332
    %v1334 = vsel %vm1328, %v1333, %v1332
    %vm1335 = vcmp.lt.s32.totalorder %v874, 0
    %v1336 = vsub.s32 0, %v874
    %v1337 = vsel %vm1335, %v1336, %v874
    %v1338 = vshrl.u32 %v1337, 5
    %v1339 = vand.u32 %v1337, 31
    %v1340 = vsub.s32 0, %v1339
    %v1341 = vsel %vm1335, %v1340, %v1339
    %vm1342 = vcmp.lt.s32.totalorder %v875, 0
    %v1343 = vsub.s32 0, %v875
    %v1344 = vsel %vm1342, %v1343, %v875
    %v1345 = vshrl.u32 %v1344, 5
    %v1346 = vand.u32 %v1344, 31
    %v1347 = vsub.s32 0, %v1346
    %v1348 = vsel %vm1342, %v1347, %v1346
    %vm1349 = vcmp.lt.s32.totalorder %v1317, 0
    %v1350 = vsub.s32 0, %v1317
    %v1351 = vsel %vm1349, %v1350, %v1317
    %v1352 = vshrl.u32 %v1351, 5
    %v1353 = vand.u32 %v1351, 31
    %v1354 = vsub.s32 0, %v1353
    %v1355 = vsel %vm1349, %v1354, %v1353
    %vm1356 = vcmp.lt.s32.totalorder %v1318, 0
    %v1357 = vsub.s32 0, %v1318
    %v1358 = vsel %vm1356, %v1357, %v1318
    %v1359 = vshrl.u32 %v1358, 5
    %v1360 = vand.u32 %v1358, 31
    %v1361 = vsub.s32 0, %v1360
    %v1362 = vsel %vm1356, %v1361, %v1360
    %vm1363 = vcmp.lt.s32.totalorder %v1319, 0
    %v1364 = vsub.s32 0, %v1319
    %v1365 = vsel %vm1363, %v1364, %v1319
    %v1366 = vshrl.u32 %v1365, 5
    %v1367 = vand.u32 %v1365, 31
    %v1368 = vsub.s32 0, %v1367
    %v1369 = vsel %vm1363, %v1368, %v1367
    %vm1370 = vcmp.lt.s32.totalorder %v1320, 0
    %v1371 = vsub.s32 0, %v1320
    %v1372 = vsel %vm1370, %v1371, %v1320
    %v1373 = vshrl.u32 %v1372, 5
    %v1374 = vand.u32 %v1372, 31
    %v1375 = vsub.s32 0, %v1374
    %v1376 = vsel %vm1370, %v1375, %v1374
    %vm1377 = vcmp.ne.s32.totalorder %v1327, 0
    %vm1378 = vcmp.ne.s32.totalorder %v1334, 0
    %vm1379 = vcmp.ne.s32.totalorder %v1341, 0
    %vm1380 = vcmp.ne.s32.totalorder %v1348, 0
    %vm1381 = vcmp.ne.s32.totalorder %v1355, 0
    %vm1382 = vcmp.ne.s32.totalorder %v1362, 0
    %vm1383 = vcmp.ne.s32.totalorder %v1369, 0
    %vm1384 = vcmp.ne.s32.totalorder %v1376, 0
    %vm1385 = vcmp.lt.s32.totalorder %v1327, 0
    %vm1386 = vcmp.lt.s32.totalorder %v1334, 0
    %vm1387 = vcmp.lt.s32.totalorder %v1341, 0
    %vm1388 = vcmp.lt.s32.totalorder %v1348, 0
    %vm1389 = vcmp.lt.s32.totalorder %v1355, 0
    %vm1390 = vcmp.lt.s32.totalorder %v1362, 0
    %vm1391 = vcmp.lt.s32.totalorder %v1369, 0
    %vm1392 = vcmp.lt.s32.totalorder %v1376, 0
    %vm1393 = vmand %vm1385, %vm1377
    %vm1394 = vmand %vm1386, %vm1378
    %vm1395 = vmand %vm1387, %vm1379
    %vm1396 = vmand %vm1388, %vm1380
    %vm1397 = vmand %vm1389, %vm1381
    %vm1398 = vmand %vm1390, %vm1382
    %vm1399 = vmand %vm1391, %vm1383
    %vm1400 = vmand %vm1392, %vm1384
    %v1401 = vadd.s32 %v1327, 32
    %v1402 = vadd.s32 %v1334, 32
    %v1403 = vadd.s32 %v1341, 32
    %v1404 = vadd.s32 %v1348, 32
    %v1405 = vadd.s32 %v1355, 32
    %v1406 = vadd.s32 %v1362, 32
    %v1407 = vadd.s32 %v1369, 32
    %v1408 = vadd.s32 %v1376, 32
    %v1409 = vsel %vm1393, %v1401, %v1327
    %v1410 = vsel %vm1394, %v1402, %v1334
    %v1411 = vsel %vm1395, %v1403, %v1341
    %v1412 = vsel %vm1396, %v1404, %v1348
    %v1413 = vsel %vm1397, %v1405, %v1355
    %v1414 = vsel %vm1398, %v1406, %v1362
    %v1415 = vsel %vm1399, %v1407, %v1369
    %v1416 = vsel %vm1400, %v1408, %v1376
    %vm1417 = vcmp.eq.s32.totalorder %v1409, 0
    %vm1418 = vcmp.eq.s32.totalorder %v1410, 0
    %vm1419 = vcmp.eq.s32.totalorder %v1411, 0
    %vm1420 = vcmp.eq.s32.totalorder %v1412, 0
    %vm1421 = vcmp.eq.s32.totalorder %v1413, 0
    %vm1422 = vcmp.eq.s32.totalorder %v1414, 0
    %vm1423 = vcmp.eq.s32.totalorder %v1415, 0
    %vm1424 = vcmp.eq.s32.totalorder %v1416, 0
    %v1425 = vsel %vm1417, 1, 0
    %v1426 = vsel %vm1418, 1, 0
    %v1427 = vsel %vm1419, 1, 0
    %v1428 = vsel %vm1420, 1, 0
    %v1429 = vsel %vm1421, 1, 0
    %v1430 = vsel %vm1422, 1, 0
    %v1431 = vsel %vm1423, 1, 0
    %v1432 = vsel %vm1424, 1, 0
    %vm1433 = vcmp.eq.s32.totalorder %v1425, 1
    %vm1434 = vcmp.eq.s32.totalorder %v1426, 1
    %vm1435 = vcmp.eq.s32.totalorder %v1427, 1
    %vm1436 = vcmp.eq.s32.totalorder %v1428, 1
    %vm1437 = vcmp.eq.s32.totalorder %v1429, 1
    %vm1438 = vcmp.eq.s32.totalorder %v1430, 1
    %vm1439 = vcmp.eq.s32.totalorder %v1431, 1
    %vm1440 = vcmp.eq.s32.totalorder %v1432, 1
    %v1441 = vsel %vm1433, 0.0, %v1316
    %v1442 = vsel %vm1434, 0.0, %v1295
    %v1443 = vsel %vm1435, 0.0, %v1297
    %v1444 = vsel %vm1436, 0.0, %v1299
    %v1445 = vsel %vm1437, 0.0, %v1301
    %v1446 = vsel %vm1438, 0.0, %v1303
    %v1447 = vsel %vm1439, 0.0, %v1305
    %v1448 = vsel %vm1440, 0.0, %v1307
    %v1449 = vrot.slane %v1277, 1
    %v1450 = vrot.slane %v1278, 1
    %v1451 = vsel %vm375, %v1449, %v1450
    %v1452 = vrot.slane %v1279, 1
    %v1453 = vsel %vm375, %v1450, %v1452
    %v1454 = vrot.slane %v1280, 1
    %v1455 = vsel %vm375, %v1452, %v1454
    %v1456 = vrot.slane %v1281, 1
    %v1457 = vsel %vm375, %v1454, %v1456
    %v1458 = vrot.slane %v1282, 1
    %v1459 = vsel %vm375, %v1456, %v1458
    %v1460 = vrot.slane %v1283, 1
    %v1461 = vsel %vm375, %v1458, %v1460
    %v1462 = vrot.slane %v1284, 1
    %v1463 = vsel %vm375, %v1460, %v1462
    %v1472 = vsel %vm375, %v1462, 0.0
    %vm1473 = vcmp.eq.s32.totalorder %v1409, 31
    %vm1474 = vcmp.eq.s32.totalorder %v1410, 31
    %vm1475 = vcmp.eq.s32.totalorder %v1411, 31
    %vm1476 = vcmp.eq.s32.totalorder %v1412, 31
    %vm1477 = vcmp.eq.s32.totalorder %v1413, 31
    %vm1478 = vcmp.eq.s32.totalorder %v1414, 31
    %vm1479 = vcmp.eq.s32.totalorder %v1415, 31
    %vm1480 = vcmp.eq.s32.totalorder %v1416, 31
    %v1481 = vsel %vm1473, 1, 0
    %v1482 = vsel %vm1474, 1, 0
    %v1483 = vsel %vm1475, 1, 0
    %v1484 = vsel %vm1476, 1, 0
    %v1485 = vsel %vm1477, 1, 0
    %v1486 = vsel %vm1478, 1, 0
    %v1487 = vsel %vm1479, 1, 0
    %v1488 = vsel %vm1480, 1, 0
    %vm1489 = vcmp.eq.s32.totalorder %v1481, 1
    %vm1490 = vcmp.eq.s32.totalorder %v1482, 1
    %vm1491 = vcmp.eq.s32.totalorder %v1483, 1
    %vm1492 = vcmp.eq.s32.totalorder %v1484, 1
    %vm1493 = vcmp.eq.s32.totalorder %v1485, 1
    %vm1494 = vcmp.eq.s32.totalorder %v1486, 1
    %vm1495 = vcmp.eq.s32.totalorder %v1487, 1
    %vm1496 = vcmp.eq.s32.totalorder %v1488, 1
    %v1497 = vsel %vm1489, 0.0, %v1451
    %v1498 = vsel %vm1490, 0.0, %v1453
    %v1499 = vsel %vm1491, 0.0, %v1455
    %v1500 = vsel %vm1492, 0.0, %v1457
    %v1501 = vsel %vm1493, 0.0, %v1459
    %v1502 = vsel %vm1494, 0.0, %v1461
    %v1503 = vsel %vm1495, 0.0, %v1463
    %v1504 = vsel %vm1496, 0.0, %v1472
    %v1505 = vld [vmem:[#allocation11] sm:$0xff]
    %v1506 = vld [vmem:[#allocation11 + $0x8] sm:$0xff]
    %v1507 = vld [vmem:[#allocation11 + $0x10] sm:$0xff]
    %v1508 = vld [vmem:[#allocation11 + $0x18] sm:$0xff]
    %v1509 = vld [vmem:[#allocation11 + $0x20] sm:$0xff]
    %v1510 = vld [vmem:[#allocation11 + $0x28] sm:$0xff]
    %v1511 = vld [vmem:[#allocation11 + $0x30] sm:$0xff]
    %v1512 = vld [vmem:[#allocation11 + $0x38] sm:$0xff]
    %v1513 = vld [vmem:[#allocation11 + $0x40] sm:$0xff]
    %v1514 = vld [vmem:[#allocation11 + $0x48] sm:$0xff]
    %v1515 = vld [vmem:[#allocation11 + $0x50] sm:$0xff]
    %v1516 = vld [vmem:[#allocation11 + $0x58] sm:$0xff]
    %v1517 = vld [vmem:[#allocation11 + $0x60] sm:$0xff]
    %v1518 = vld [vmem:[#allocation11 + $0x68] sm:$0xff]
    %v1519 = vld [vmem:[#allocation11 + $0x70] sm:$0xff]
    %v1520 = vld [vmem:[#allocation11 + $0x78] sm:$0xff]
    %v1521 = vld [vmem:[#allocation11 + $0x80] sm:$0xff]
    %v1522 = vld [vmem:[#allocation11 + $0x88] sm:$0xff]
    %v1523 = vld [vmem:[#allocation11 + $0x90] sm:$0xff]
    %v1524 = vld [vmem:[#allocation11 + $0x98] sm:$0xff]
    %v1525 = vld [vmem:[#allocation11 + $0xa0] sm:$0xff]
    %v1526 = vld [vmem:[#allocation11 + $0xa8] sm:$0xff]
    %v1527 = vld [vmem:[#allocation11 + $0xb0] sm:$0xff]
    %v1528 = vld [vmem:[#allocation11 + $0xb8] sm:$0xff]
    %v1529 = vld [vmem:[#allocation11 + $0xc0] sm:$0xff]
    %v1530 = vld [vmem:[#allocation11 + $0xc8] sm:$0xff]
    %v1531 = vld [vmem:[#allocation11 + $0xd0] sm:$0xff]
    %v1532 = vld [vmem:[#allocation11 + $0xd8] sm:$0xff]
    %v1533 = vld [vmem:[#allocation11 + $0xe0] sm:$0xff]
    %v1534 = vld [vmem:[#allocation11 + $0xe8] sm:$0xff]
    %v1535 = vld [vmem:[#allocation11 + $0xf0] sm:$0xff]
    %v1536 = vld [vmem:[#allocation11 + $0xf8] sm:$0xff]
    %v1537 = vld [vmem:[#allocation11 + $0x100] sm:$0xff]
    %v1538 = vld [vmem:[#allocation11 + $0x108] sm:$0xff]
    %v1539 = vld [vmem:[#allocation11 + $0x110] sm:$0xff]
    %v1540 = vld [vmem:[#allocation11 + $0x118] sm:$0xff]
    %v1541 = vld [vmem:[#allocation11 + $0x120] sm:$0xff]
    %v1542 = vld [vmem:[#allocation11 + $0x128] sm:$0xff]
    %v1543 = vld [vmem:[#allocation11 + $0x130] sm:$0xff]
    %v1544 = vld [vmem:[#allocation11 + $0x138] sm:$0xff]
    %v1545 = vld [vmem:[#allocation11 + $0x140] sm:$0xff]
    %v1546 = vld [vmem:[#allocation11 + $0x148] sm:$0xff]
    %v1547 = vld [vmem:[#allocation11 + $0x150] sm:$0xff]
    %v1548 = vld [vmem:[#allocation11 + $0x158] sm:$0xff]
    %v1549 = vld [vmem:[#allocation11 + $0x160] sm:$0xff]
    %v1550 = vld [vmem:[#allocation11 + $0x168] sm:$0xff]
    %v1551 = vld [vmem:[#allocation11 + $0x170] sm:$0xff]
    %v1552 = vld [vmem:[#allocation11 + $0x178] sm:$0xff]
    %v1553 = vld [vmem:[%s8] sm:$0x1]
    %v1555 = vperm.slane %v1553, 0
    %1557 = vmatpush.msra.mxu0 %v1520
    %1558 = vmatpush.msra.mxu0 %v1519
    %1559 = vmatpush.msra.mxu0 %v1518
    %1560 = vmatpush.msra.mxu0 %v1517
    %1561 = vmatpush.msra.mxu0 %v1516
    %1562 = vmatpush.msra.mxu0 %v1515
    %1563 = vmatpush.msra.mxu0 %v1514
    %1564 = vmatpush.msra.mxu0 %v1513
    %1565 = vmatpush.msra.mxu0 %v1512
    %1566 = vmatpush.msra.mxu0 %v1511
    %1567 = vmatpush.msra.mxu0 %v1510
    %1568 = vmatpush.msra.mxu0 %v1509
    %1569 = vmatpush.msra.mxu0 %v1508
    %1570 = vmatpush.msra.mxu0 %v1507
    %1571 = vmatpush.msra.mxu0 %v1506
    %1572 = vmatpush.msra.mxu0 %v1505
    %1573 = vmatmul.f32.gmra.mxu0 %v1441
    %v1574 = vpop.f32.mrf.mxu0
    %v1575 = vadd.f32 %v1555, %v1574
    %1576 = vmatmul.f32.gmra.mxu0 %v1442
    %v1577 = vpop.f32.mrf.mxu0
    %v1578 = vadd.f32 %v1555, %v1577
    %1579 = vmatmul.f32.gmra.mxu0 %v1443
    %v1580 = vpop.f32.mrf.mxu0
    %v1581 = vadd.f32 %v1555, %v1580
    %1582 = vmatmul.f32.gmra.mxu0 %v1444
    %v1583 = vpop.f32.mrf.mxu0
    %v1584 = vadd.f32 %v1555, %v1583
    %1585 = vmatmul.f32.gmra.mxu0 %v1445
    %v1586 = vpop.f32.mrf.mxu0
    %v1587 = vadd.f32 %v1555, %v1586
    %1588 = vmatmul.f32.gmra.mxu0 %v1446
    %v1589 = vpop.f32.mrf.mxu0
    %v1590 = vadd.f32 %v1555, %v1589
    %1591 = vmatmul.f32.gmra.mxu0 %v1447
    %v1592 = vpop.f32.mrf.mxu0
    %v1593 = vadd.f32 %v1555, %v1592
    %1594 = vmatmul.f32.gmra.mxu0 %v1448
    %v1595 = vpop.f32.mrf.mxu0
    %v1596 = vadd.f32 %v1555, %v1595
    %1597 = vdwg.mxu0
    %1598 = vmatpush.msra.mxu0 %v1536
    %1599 = vmatpush.msra.mxu0 %v1535
    %1600 = vmatpush.msra.mxu0 %v1534
    %1601 = vmatpush.msra.mxu0 %v1533
    %1602 = vmatpush.msra.mxu0 %v1532
    %1603 = vmatpush.msra.mxu0 %v1531
    %1604 = vmatpush.msra.mxu0 %v1530
    %1605 = vmatpush.msra.mxu0 %v1529
    %1606 = vmatpush.msra.mxu0 %v1528
    %1607 = vmatpush.msra.mxu0 %v1527
    %1608 = vmatpush.msra.mxu0 %v1526
    %1609 = vmatpush.msra.mxu0 %v1525
    %1610 = vmatpush.msra.mxu0 %v1524
    %1611 = vmatpush.msra.mxu0 %v1523
    %1612 = vmatpush.msra.mxu0 %v1522
    %1613 = vmatpush.msra.mxu0 %v1521
    %1614 = vmatmul.f32.gmra.mxu0 %v1277
    %v1615 = vpop.f32.mrf.mxu0
    %v1616 = vadd.f32 %v1575, %v1615
    %1617 = vmatmul.f32.gmra.mxu0 %v1278
    %v1618 = vpop.f32.mrf.mxu0
    %v1619 = vadd.f32 %v1578, %v1618
    %1620 = vmatmul.f32.gmra.mxu0 %v1279
    %v1621 = vpop.f32.mrf.mxu0
    %v1622 = vadd.f32 %v1581, %v1621
    %1623 = vmatmul.f32.gmra.mxu0 %v1280
    %v1624 = vpop.f32.mrf.mxu0
    %v1625 = vadd.f32 %v1584, %v1624
    %1626 = vmatmul.f32.gmra.mxu0 %v1281
    %v1627 = vpop.f32.mrf.mxu0
    %v1628 = vadd.f32 %v1587, %v1627
    %1629 = vmatmul.f32.gmra.mxu0 %v1282
    %v1630 = vpop.f32.mrf.mxu0
    %v1631 = vadd.f32 %v1590, %v1630
    %1632 = vmatmul.f32.gmra.mxu0 %v1283
    %v1633 = vpop.f32.mrf.mxu0
    %v1634 = vadd.f32 %v1593, %v1633
    %1635 = vmatmul.f32.gmra.mxu0 %v1284
    %v1636 = vpop.f32.mrf.mxu0
    %v1637 = vadd.f32 %v1596, %v1636
    %1638 = vdwg.mxu0
    %1639 = vmatpush.msra.mxu0 %v1552
    %1640 = vmatpush.msra.mxu0 %v1551
    %1641 = vmatpush.msra.mxu0 %v1550
    %1642 = vmatpush.msra.mxu0 %v1549
    %1643 = vmatpush.msra.mxu0 %v1548
    %1644 = vmatpush.msra.mxu0 %v1547
    %1645 = vmatpush.msra.mxu0 %v1546
    %1646 = vmatpush.msra.mxu0 %v1545
    %1647 = vmatpush.msra.mxu0 %v1544
    %1648 = vmatpush.msra.mxu0 %v1543
    %1649 = vmatpush.msra.mxu0 %v1542
    %1650 = vmatpush.msra.mxu0 %v1541
    %1651 = vmatpush.msra.mxu0 %v1540
    %1652 = vmatpush.msra.mxu0 %v1539
    %1653 = vmatpush.msra.mxu0 %v1538
    %1654 = vmatpush.msra.mxu0 %v1537
    %1655 = vmatmul.f32.gmra.mxu0 %v1497
    %v1656 = vpop.f32.mrf.mxu0
    %v1657 = vadd.f32 %v1616, %v1656
    %1658 = vmatmul.f32.gmra.mxu0 %v1498
    %v1659 = vpop.f32.mrf.mxu0
    %v1660 = vadd.f32 %v1619, %v1659
    %1661 = vmatmul.f32.gmra.mxu0 %v1499
    %v1662 = vpop.f32.mrf.mxu0
    %v1663 = vadd.f32 %v1622, %v1662
    %1664 = vmatmul.f32.gmra.mxu0 %v1500
    %v1665 = vpop.f32.mrf.mxu0
    %v1666 = vadd.f32 %v1625, %v1665
    %1667 = vmatmul.f32.gmra.mxu0 %v1501
    %v1668 = vpop.f32.mrf.mxu0
    %v1669 = vadd.f32 %v1628, %v1668
    %1670 = vmatmul.f32.gmra.mxu0 %v1502
    %v1671 = vpop.f32.mrf.mxu0
    %v1672 = vadd.f32 %v1631, %v1671
    %1673 = vmatmul.f32.gmra.mxu0 %v1503
    %v1674 = vpop.f32.mrf.mxu0
    %v1675 = vadd.f32 %v1634, %v1674
    %1676 = vmatmul.f32.gmra.mxu0 %v1504
    %v1677 = vpop.f32.mrf.mxu0
    %v1678 = vadd.f32 %v1637, %v1677
    %1679 = vdwg.mxu0
    %1680 = vst [vmem:[#allocation13] sm:$0xff] %v1657
    %1681 = vst [vmem:[#allocation13 + $0x8] sm:$0xff] %v1660
    %1682 = vst [vmem:[#allocation13 + $0x10] sm:$0xff] %v1663
    %1683 = vst [vmem:[#allocation13 + $0x18] sm:$0xff] %v1666
    %1684 = vst [vmem:[#allocation13 + $0x20] sm:$0xff] %v1669
    %1685 = vst [vmem:[#allocation13 + $0x28] sm:$0xff] %v1672
    %1686 = vst [vmem:[#allocation13 + $0x30] sm:$0xff] %v1675
    %1687 = vst [vmem:[#allocation13 + $0x38] sm:$0xff] %v1678
    // Predicated region
    $region62: #{tpu_custom_call.1} parent=1 // pred_check
      _
    $region63: #{tpu_custom_call.1} parent=1 // pred_check_branch
      %1689 = sbr.rel (0) target = $region65
    $region64: #{tpu_custom_call.1} parent=1 // pred_region
      %1691 = vsyncadd [#allocation4], 0
      %s1692 = sshll.u32 [#allocation13], 4
      %s1693 = int_to_ptr.vmem [resolvable:$true] %s1692
      %s1694 = sshll.u32 %s9, 4
      %s1695 = int_to_ptr.hbm [resolvable:$true] %s1694
      %1700 = dma.vmem_to_hbm [thread:$0]  %s1693, 1024, %s1695, [#allocation4], 128, 128, 8
    $region65: #{tpu_custom_call.1} parent=1 // pred_fallthru
      _
    // Predicated region
    $region66: #{tpu_custom_call.1} parent=1 // pred_check
      _
    $region67: #{tpu_custom_call.1} parent=1 // pred_check_branch
      %1702 = sbr.rel (0) target = $region69
    $region68: #{tpu_custom_call.1} parent=1 // pred_region
      %1704 = dma.done [#allocation4], 1024
    $region69: #{tpu_custom_call.1} parent=1 // pred_fallthru
      _
    %1705 = vsyncpa [#allocation3], 1
    %1706 = vsyncpa [#allocation6], 1
    %1707 = vsyncpa [#allocation9], 1
    %1708 = vsyncpa [#allocation12], 1
    %1709 = vsyncpa [#allocation4], 1

</llo_original>
